<compile_context>
chip_gen: v7x
topology: tpu7x:2x2x1
jax: 0.10.0
libtpu: 0.0.40
codegen_flags: <defaults>
</compile_context>

<pallas_src>
import jax
import jax.numpy as jnp
from jax import lax
from jax.experimental import pallas as pl
from jax.experimental.pallas import tpu as pltpu

# ---- synthetic "consts" (typical values for this model family) -------------
NUM_Z_CHANNELS = 50
NUM_ENCODER_CHANNELS = 64
DIMS = (
    NUM_Z_CHANNELS,
    NUM_ENCODER_CHANNELS,
    NUM_ENCODER_CHANNELS // 2,
    NUM_ENCODER_CHANNELS // 4,
)
BN_EPS = 1e-5

D1, D2, D3 = DIMS[1], DIMS[2], DIMS[3]  # 64, 32, 16
NUM_PHASES = 4                          # 3 BN-stat sweeps + 1 output sweep
MAX_TILE_B = 512                        # lanes per grid step (batch tile)

# Row offsets of each packed per-feature parameter inside the (SLAB_ROWS, 1)
# slab.  All offsets are multiples of 8 -> every in-kernel slice is
# sublane-aligned.
OFF_G1 = 0
OFF_BE1 = OFF_G1 + D1          # 64
OFF_G2 = OFF_BE1 + D1          # 128
OFF_BE2 = OFF_G2 + D2          # 160
OFF_G3 = OFF_BE2 + D2          # 192
OFF_BE3 = OFF_G3 + D3          # 208
OFF_B4 = OFF_BE3 + D3          # 224
SLAB_ROWS = ((OFF_B4 + 1 + 7) // 8) * 8  # 232

# Row offsets of each layer's BN statistics inside the VMEM stats scratch.
STAT_OFF1 = 0                  # 64 rows
STAT_OFF2 = STAT_OFF1 + D1     # 64
STAT_OFF3 = STAT_OFF2 + D2     # 96
STAT_ROWS = ((STAT_OFF3 + D3 + 7) // 8) * 8  # 112


def _make_kernel(batch, tile_b):
    """Build the phase/tile kernel for a given static batch size and lane tile."""
    inv_b = 1.0 / float(batch)
    needs_mask = (batch % tile_b) != 0  # only the last tile can be partial

    def kernel(z_ref, w1_ref, w2_ref, w3_ref, w4_ref, p_ref, out_ref,
               sum_ref, sq_ref):
        p = pl.program_id(0)   # phase (outer, sequential)
        t = pl.program_id(1)   # batch tile (inner)

        @pl.when(jnp.logical_and(p == 0, t == 0))
        def _init_stats():
            sum_ref[...] = jnp.zeros_like(sum_ref)
            sq_ref[...] = jnp.zeros_like(sq_ref)

        if needs_mask:
            valid = batch - t * tile_b
            lane = lax.broadcasted_iota(jnp.int32, (1, tile_b), 1)
            mask = lane < valid
        else:
            mask = None

        def accumulate(h, off, dim):
            # One sweep: sum and sum-of-squares (var = E[x^2] - E[x]^2 later).
            hm = h if mask is None else jnp.where(mask, h, 0.0)
            sum_ref[off:off + dim, :] += jnp.sum(hm, axis=1, keepdims=True)
            sq_ref[off:off + dim, :] += jnp.sum(hm * hm, axis=1, keepdims=True)

        def scale_shift(off, g_off, be_off, dim):
            # Fold train-mode BN into a single per-feature affine (tiny (dim,1)
            # vectors: EUP rsqrt + a few VPU ops, negligible per tile).
            mean = sum_ref[off:off + dim, :] * inv_b
            var = jnp.maximum(sq_ref[off:off + dim, :] * inv_b - mean * mean, 0.0)
            g = p_ref[g_off:g_off + dim, :]
            be = p_ref[be_off:be_off + dim, :]
            scale = g * lax.rsqrt(var + BN_EPS)
            shift = be - mean * scale
            return scale, shift

        # fc1: Linear(50 -> 64), bias dropped (cancels under train-mode BN).
        # Transpose of z folded into the MXU feed: contract last dims of both
        # (64, 50) x (TILE_B, 50) -> (64, TILE_B); batch stays on lanes.
        h1 = lax.dot_general(w1_ref[...], z_ref[...],
                             (((1,), (1,)), ((), ())),
                             preferred_element_type=jnp.float32)

        @pl.when(p == 0)
        def _phase0():
            accumulate(h1, STAT_OFF1, D1)

        @pl.when(p >= 1)
        def _after_bn1():
            s1, b1 = scale_shift(STAT_OFF1, OFF_G1, OFF_BE1, D1)
            a1 = jnp.maximum(h1 * s1 + b1, 0.0)                       # (64, T)
            h2 = jnp.dot(w2_ref[...], a1,
                         preferred_element_type=jnp.float32)          # (32, T)

            @pl.when(p == 1)
            def _phase1():
                accumulate(h2, STAT_OFF2, D2)

            @pl.when(p >= 2)
            def _after_bn2():
                s2, b2 = scale_shift(STAT_OFF2, OFF_G2, OFF_BE2, D2)
                a2 = jnp.maximum(h2 * s2 + b2, 0.0)                   # (32, T)
                h3 = jnp.dot(w3_ref[...], a2,
                             preferred_element_type=jnp.float32)      # (16, T)

                @pl.when(p == 2)
                def _phase2():
                    accumulate(h3, STAT_OFF3, D3)

                @pl.when(p == 3)
                def _phase3():
                    s3, b3 = scale_shift(STAT_OFF3, OFF_G3, OFF_BE3, D3)
                    a3 = jnp.maximum(h3 * s3 + b3, 0.0)               # (16, T)
                    # fc4 (16 -> 1): VPU multiply + sublane reduce; a 1-row MXU
                    # pass would waste the systolic array.
                    b4 = p_ref[OFF_B4:OFF_B4 + 1, :]                  # (1, 1)
                    out = jnp.sum(a3 * w4_ref[...], axis=0,
                                  keepdims=True) + b4                 # (1, T)
                    out_ref[...] = out.astype(out_ref.dtype)

    return kernel


def _cost_estimate(batch):
    useful_flops = 2 * batch * (DIMS[0] * D1 + D1 * D2 + D2 * D3 + D3)
    bytes_z = 4 * batch * DIMS[0] * NUM_PHASES          # z streamed per phase
    bytes_w = 4 * (D1 * DIMS[0] + D2 * D1 + D3 * D2 + D3 + SLAB_ROWS)
    bytes_out = 4 * batch
    return pl.CostEstimate(flops=useful_flops,
                           transcendentals=3 * (D1 + D2 + D3),
                           bytes_accessed=bytes_z + bytes_w + bytes_out)


@jax.jit
def discriminator_z(z, kparams):
    """z: (B, C) float32; kparams = (w1, w2, w3, w4col, slab) from pack_for_kernel."""
    w1, w2, w3, w4col, slab = kparams
    B, C = z.shape
    tile_b = MAX_TILE_B if B >= MAX_TILE_B else B   # B < 512: single full tile
    num_tiles = pl.cdiv(B, tile_b)
    kernel = _make_kernel(B, tile_b)

    out = pl.pallas_call(
        kernel,
        out_shape=jax.ShapeDtypeStruct((1, B), jnp.float32),   # lane-dense output
        grid_spec=pltpu.PrefetchScalarGridSpec(
            num_scalar_prefetch=0,
            grid=(NUM_PHASES, num_tiles),
            in_specs=[
                pl.BlockSpec((tile_b, C), lambda p, t: (t, 0)),        # z tile
                pl.BlockSpec((D1, DIMS[0]), lambda p, t: (0, 0)),      # w1 (resident)
                pl.BlockSpec((D2, D1), lambda p, t: (0, 0)),           # w2 (resident)
                pl.BlockSpec((D3, D2), lambda p, t: (0, 0)),           # w3 (resident)
                pl.BlockSpec((D3, 1), lambda p, t: (0, 0)),            # w4 column
                pl.BlockSpec((SLAB_ROWS, 1), lambda p, t: (0, 0)),     # param slab
            ],
            out_specs=pl.BlockSpec((1, tile_b), lambda p, t: (0, t)),
            scratch_shapes=[
                pltpu.VMEM((STAT_ROWS, 1), jnp.float32),   # per-layer sum(h)
                pltpu.VMEM((STAT_ROWS, 1), jnp.float32),   # per-layer sum(h*h)
            ]),
        compiler_params=pltpu.CompilerParams(
            # Both axes are sequential: phases cascade and tiles accumulate
            # full-batch BN stats into shared scratch.
            dimension_semantics=("arbitrary", "arbitrary"),
            vmem_limit_bytes=32 * 1024 * 1024),   # O(TILE_B) footprint, headroom on v7x
        cost_estimate=_cost_estimate(B),
    )(z, w1, w2, w3, w4col, slab)
    return out.reshape(B, 1)   # match the PyTorch module's (B, 1)


def init_params(key):
    """PyTorch-layout synthetic params: (w1,b1,g1,be1, w2,b2,g2,be2, w3,b3,g3,be3, w4,b4).

    Linear weights are (out_dim, in_dim) like nn.Linear; biases/gamma/beta are 1-D.
    """
    params = []
    keys = jax.random.split(key, 4)
    k_iter = iter(keys)
    for in_dim, out_dim in zip(DIMS[:-1], DIMS[1:]):
        bound = 1.0 / float(in_dim) ** 0.5
        kw, kb = jax.random.split(next(k_iter))
        w = jax.random.uniform(kw, (out_dim, in_dim), jnp.float32, -bound, bound)
        b = jax.random.uniform(kb, (out_dim,), jnp.float32, -bound, bound)
        gamma = jnp.ones((out_dim,), jnp.float32)
        beta = jnp.zeros((out_dim,), jnp.float32)
        params += [w, b, gamma, beta]
    in_dim = DIMS[-1]
    bound = 1.0 / float(in_dim) ** 0.5
    kw, kb = jax.random.split(next(k_iter))
    w4 = jax.random.uniform(kw, (1, in_dim), jnp.float32, -bound, bound)
    b4 = jax.random.uniform(kb, (1,), jnp.float32, -bound, bound)
    params += [w4, b4]
    return tuple(params)


def pack_for_kernel(params):
    """Kernel-side params: fc1-fc3 biases dropped (train-mode BN cancels them),
    w4 as a (16, 1) column for the VPU path, gamma/beta/b4 packed into one slab."""
    (w1, _b1, g1, be1, w2, _b2, g2, be2, w3, _b3, g3, be3, w4, b4) = params
    flat = jnp.concatenate([g1, be1, g2, be2, g3, be3, b4])   # (225,)
    flat = jnp.pad(flat, (0, SLAB_ROWS - flat.shape[0]))
    slab = flat.reshape(SLAB_ROWS, 1)                          # (232, 1)
    return (w1, w2, w3, w4.T, slab)


def reference_forward(z, params):
    """Pure-JAX reference with the *full* PyTorch semantics (biases included),
    to validate that dropping fc1-fc3 biases in the kernel is a no-op."""
    (w1, b1, g1, be1, w2, b2, g2, be2, w3, b3, g3, be3, w4, b4) = params

    def bn_relu(h, g, be):
        m = jnp.mean(h, axis=0, keepdims=True)
        v = jnp.mean((h - m) ** 2, axis=0, keepdims=True)
        return jnp.maximum((h - m) / jnp.sqrt(v + BN_EPS) * g + be, 0.0)

    h = bn_relu(z @ w1.T + b1, g1, be1)
    h = bn_relu(h @ w2.T + b2, g2, be2)
    h = bn_relu(h @ w3.T + b3, g3, be3)
    return h @ w4.T + b4


if __name__ == "__main__":
    key = jax.random.PRNGKey(0)
    k_z, k_p, k_z2 = jax.random.split(key, 3)

    params = init_params(k_p)
    kparams = pack_for_kernel(params)

    # Small batch: single lane tile (grid = (4, 1); z DMA'd exactly once).
    B = 8
    z = jax.random.normal(k_z, (B, NUM_Z_CHANNELS), jnp.float32)
    out = discriminator_z(z, kparams)
    jax.block_until_ready(out)
    ref = reference_forward(z, params)
    assert out.shape == (B, 1)
    assert jnp.allclose(out, ref, atol=1e-4, rtol=1e-4), (out, ref)

    # Larger, non-multiple batch: exercises the multi-tile path with
    # edge-lane masking of the BN statistics (grid = (4, 2), TILE_B = 512).
    B2 = 600
    z2 = jax.random.normal(k_z2, (B2, NUM_Z_CHANNELS), jnp.float32)
    out2 = discriminator_z(z2, kparams)
    jax.block_until_ready(out2)
    ref2 = reference_forward(z2, params)
    assert out2.shape == (B2, 1)
    assert jnp.allclose(out2, ref2, atol=1e-4, rtol=1e-4), (
        float(jnp.max(jnp.abs(out2 - ref2))))

    print("KERNEL_OK")
</pallas_src>

<mosaic_0001>
module attributes {stable_mosaic.version = 11 : i64} {
  func.func @kernel(%arg0: i32, %arg1: i32, %arg2: memref<8x50xf32, #tpu.memory_space<vmem>>, %arg3: memref<64x50xf32, #tpu.memory_space<vmem>>, %arg4: memref<32x64xf32, #tpu.memory_space<vmem>>, %arg5: memref<16x32xf32, #tpu.memory_space<vmem>>, %arg6: memref<16x1xf32, #tpu.memory_space<vmem>>, %arg7: memref<232x1xf32, #tpu.memory_space<vmem>>, %arg8: memref<1x8xf32, #tpu.memory_space<vmem>>, %arg9: memref<112x1xf32, #tpu.memory_space<vmem>>, %arg10: memref<112x1xf32, #tpu.memory_space<vmem>>) attributes {dimension_semantics = [#tpu.dimension_semantics<arbitrary>, #tpu.dimension_semantics<arbitrary>], iteration_bounds = array<i64: 4, 1>, scalar_prefetch = 0 : i64, scratch_operands = 2 : i64, tpu.core_type = #tpu.core_type<tc>, window_params = [{transform_indices = @transform_0, window_bounds = array<i64: 8, 50>}, {pipeline_mode = #tpu.pipeline_mode<synchronous>, transform_indices = @transform_1, window_bounds = array<i64: 64, 50>}, {pipeline_mode = #tpu.pipeline_mode<synchronous>, transform_indices = @transform_2, window_bounds = array<i64: 32, 64>}, {pipeline_mode = #tpu.pipeline_mode<synchronous>, transform_indices = @transform_3, window_bounds = array<i64: 16, 32>}, {pipeline_mode = #tpu.pipeline_mode<synchronous>, transform_indices = @transform_4, window_bounds = array<i64: 16, 1>}, {pipeline_mode = #tpu.pipeline_mode<synchronous>, transform_indices = @transform_5, window_bounds = array<i64: 232, 1>}, {transform_indices = @transform_6, window_bounds = array<i64: 1, 8>}]} {
    %c0_i32 = arith.constant 0 : i32
    %0 = arith.cmpi eq, %arg0, %c0_i32 : i32
    %c0_i32_0 = arith.constant 0 : i32
    %1 = arith.cmpi eq, %arg1, %c0_i32_0 : i32
    %2 = arith.andi %0, %1 : i1
    %3 = arith.extui %2 : i1 to i32
    %c0_i32_1 = arith.constant 0 : i32
    %4 = arith.cmpi ne, %3, %c0_i32_1 : i32
    scf.if %4 {
      %cst_8 = arith.constant 0.000000e+00 : f32
      %14 = vector.broadcast %cst_8 : f32 to vector<112x1xf32>
      %c0_9 = arith.constant 0 : index
      %c0_10 = arith.constant 0 : index
      %15 = vector.load %arg9[%c0_9, %c0_10] : memref<112x1xf32, #tpu.memory_space<vmem>>, vector<112x1xf32>
      tpu.vector_store %arg9[%c0_9, %c0_10], %14 {strides = array<i32>} : memref<112x1xf32, #tpu.memory_space<vmem>>, vector<112x1xf32>,
      %cst_11 = arith.constant 0.000000e+00 : f32
      %16 = vector.broadcast %cst_11 : f32 to vector<112x1xf32>
      %c0_12 = arith.constant 0 : index
      %c0_13 = arith.constant 0 : index
      %17 = vector.load %arg10[%c0_12, %c0_13] : memref<112x1xf32, #tpu.memory_space<vmem>>, vector<112x1xf32>
      tpu.vector_store %arg10[%c0_12, %c0_13], %16 {strides = array<i32>} : memref<112x1xf32, #tpu.memory_space<vmem>>, vector<112x1xf32>,
    } else {
    }
    %c0 = arith.constant 0 : index
    %c0_2 = arith.constant 0 : index
    %5 = vector.load %arg3[%c0, %c0_2] : memref<64x50xf32, #tpu.memory_space<vmem>>, vector<64x50xf32>
    %c0_3 = arith.constant 0 : index
    %c0_4 = arith.constant 0 : index
    %6 = vector.load %arg2[%c0_3, %c0_4] : memref<8x50xf32, #tpu.memory_space<vmem>>, vector<8x50xf32>
    %cst = arith.constant dense<0.000000e+00> : vector<64x8xf32>
    %7 = tpu.matmul %5, %6, %cst {dimension_numbers = #tpu.dot_dimension_numbers<[1], [1], [0], [0], [0, 0, 1, 0], [], []>} : vector<64x50xf32>, vector<8x50xf32>, vector<64x8xf32> -> vector<64x8xf32>
    %c0_i32_5 = arith.constant 0 : i32
    %8 = arith.cmpi eq, %arg0, %c0_i32_5 : i32
    %9 = arith.extui %8 : i1 to i32
    %c0_i32_6 = arith.constant 0 : i32
    %10 = arith.cmpi ne, %9, %c0_i32_6 : i32
    scf.if %10 {
      %c0_8 = arith.constant 0 : index
      %c0_9 = arith.constant 0 : index
      %14 = vector.load %arg9[%c0_8, %c0_9] : memref<112x1xf32, #tpu.memory_space<vmem>>, vector<64x1xf32>
      %cst_10 = arith.constant dense<0.000000e+00> : vector<64xf32>
      %15 = vector.multi_reduction <add>, %7, %cst_10 [1] : vector<64x8xf32> to vector<64xf32>
      %16 = vector.shape_cast %15 : vector<64xf32> to vector<64x1xf32>
      %17 = arith.addf %14, %16 : vector<64x1xf32>
      %c0_11 = arith.constant 0 : index
      %c0_12 = arith.constant 0 : index
      %18 = vector.load %arg9[%c0_11, %c0_12] : memref<112x1xf32, #tpu.memory_space<vmem>>, vector<64x1xf32>
      tpu.vector_store %arg9[%c0_11, %c0_12], %17 {strides = array<i32>} : memref<112x1xf32, #tpu.memory_space<vmem>>, vector<64x1xf32>,
      %c0_13 = arith.constant 0 : index
      %c0_14 = arith.constant 0 : index
      %19 = vector.load %arg10[%c0_13, %c0_14] : memref<112x1xf32, #tpu.memory_space<vmem>>, vector<64x1xf32>
      %20 = arith.mulf %7, %7 : vector<64x8xf32>
      %cst_15 = arith.constant dense<0.000000e+00> : vector<64xf32>
      %21 = vector.multi_reduction <add>, %20, %cst_15 [1] : vector<64x8xf32> to vector<64xf32>
      %22 = vector.shape_cast %21 : vector<64xf32> to vector<64x1xf32>
      %23 = arith.addf %19, %22 : vector<64x1xf32>
      %c0_16 = arith.constant 0 : index
      %c0_17 = arith.constant 0 : index
      %24 = vector.load %arg10[%c0_16, %c0_17] : memref<112x1xf32, #tpu.memory_space<vmem>>, vector<64x1xf32>
      tpu.vector_store %arg10[%c0_16, %c0_17], %23 {strides = array<i32>} : memref<112x1xf32, #tpu.memory_space<vmem>>, vector<64x1xf32>,
    } else {
    }
    %c1_i32 = arith.constant 1 : i32
    %11 = arith.cmpi sge, %arg0, %c1_i32 : i32
    %12 = arith.extui %11 : i1 to i32
    %c0_i32_7 = arith.constant 0 : i32
    %13 = arith.cmpi ne, %12, %c0_i32_7 : i32
    scf.if %13 {
      %c0_8 = arith.constant 0 : index
      %c0_9 = arith.constant 0 : index
      %14 = vector.load %arg9[%c0_8, %c0_9] : memref<112x1xf32, #tpu.memory_space<vmem>>, vector<64x1xf32>
      %cst_10 = arith.constant 1.250000e-01 : f32
      %15 = vector.broadcast %cst_10 : f32 to vector<64x1xf32>
      %16 = arith.mulf %14, %15 : vector<64x1xf32>
      %c0_11 = arith.constant 0 : index
      %c0_12 = arith.constant 0 : index
      %17 = vector.load %arg10[%c0_11, %c0_12] : memref<112x1xf32, #tpu.memory_space<vmem>>, vector<64x1xf32>
      %cst_13 = arith.constant 1.250000e-01 : f32
      %18 = vector.broadcast %cst_13 : f32 to vector<64x1xf32>
      %19 = arith.mulf %17, %18 : vector<64x1xf32>
      %20 = arith.mulf %16, %16 : vector<64x1xf32>
      %21 = arith.subf %19, %20 : vector<64x1xf32>
      %cst_14 = arith.constant 0.000000e+00 : f32
      %22 = vector.broadcast %cst_14 : f32 to vector<64x1xf32>
      %23 = arith.maximumf %21, %22 : vector<64x1xf32>
      %c0_15 = arith.constant 0 : index
      %c0_16 = arith.constant 0 : index
      %24 = vector.load %arg7[%c0_15, %c0_16] : memref<232x1xf32, #tpu.memory_space<vmem>>, vector<64x1xf32>
      %c64 = arith.constant 64 : index
      %c0_17 = arith.constant 0 : index
      %25 = vector.load %arg7[%c64, %c0_17] : memref<232x1xf32, #tpu.memory_space<vmem>>, vector<64x1xf32>
      %cst_18 = arith.constant 9.99999974E-6 : f32
      %26 = vector.broadcast %cst_18 : f32 to vector<64x1xf32>
      %27 = arith.addf %23, %26 : vector<64x1xf32>
      %28 = math.rsqrt %27 : vector<64x1xf32>
      %29 = arith.mulf %24, %28 : vector<64x1xf32>
      %30 = arith.mulf %16, %29 : vector<64x1xf32>
      %31 = arith.subf %25, %30 : vector<64x1xf32>
      %32 = vector.broadcast %29 : vector<64x1xf32> to vector<64x8xf32>
      %33 = arith.mulf %7, %32 : vector<64x8xf32>
      %34 = vector.broadcast %31 : vector<64x1xf32> to vector<64x8xf32>
      %35 = arith.addf %33, %34 : vector<64x8xf32>
      %cst_19 = arith.constant 0.000000e+00 : f32
      %36 = vector.broadcast %cst_19 : f32 to vector<64x8xf32>
      %37 = arith.maximumf %35, %36 : vector<64x8xf32>
      %c0_20 = arith.constant 0 : index
      %c0_21 = arith.constant 0 : index
      %38 = vector.load %arg4[%c0_20, %c0_21] : memref<32x64xf32, #tpu.memory_space<vmem>>, vector<32x64xf32>
      %cst_22 = arith.constant dense<0.000000e+00> : vector<32x8xf32>
      %39 = tpu.matmul %38, %37, %cst_22 {dimension_numbers = #tpu.dot_dimension_numbers<[1], [0], [0], [1], [0, 0, 1, 1], [], []>} : vector<32x64xf32>, vector<64x8xf32>, vector<32x8xf32> -> vector<32x8xf32>
      %c1_i32_23 = arith.constant 1 : i32
      %40 = arith.cmpi eq, %arg0, %c1_i32_23 : i32
      %41 = arith.extui %40 : i1 to i32
      %c0_i32_24 = arith.constant 0 : i32
      %42 = arith.cmpi ne, %41, %c0_i32_24 : i32
      scf.if %42 {
        %c64_26 = arith.constant 64 : index
        %c0_27 = arith.constant 0 : index
        %46 = vector.load %arg9[%c64_26, %c0_27] : memref<112x1xf32, #tpu.memory_space<vmem>>, vector<32x1xf32>
        %cst_28 = arith.constant dense<0.000000e+00> : vector<32xf32>
        %47 = vector.multi_reduction <add>, %39, %cst_28 [1] : vector<32x8xf32> to vector<32xf32>
        %48 = vector.shape_cast %47 : vector<32xf32> to vector<32x1xf32>
        %49 = arith.addf %46, %48 : vector<32x1xf32>
        %c64_29 = arith.constant 64 : index
        %c0_30 = arith.constant 0 : index
        %50 = vector.load %arg9[%c64_29, %c0_30] : memref<112x1xf32, #tpu.memory_space<vmem>>, vector<32x1xf32>
        tpu.vector_store %arg9[%c64_29, %c0_30], %49 {strides = array<i32>} : memref<112x1xf32, #tpu.memory_space<vmem>>, vector<32x1xf32>,
        %c64_31 = arith.constant 64 : index
        %c0_32 = arith.constant 0 : index
        %51 = vector.load %arg10[%c64_31, %c0_32] : memref<112x1xf32, #tpu.memory_space<vmem>>, vector<32x1xf32>
        %52 = arith.mulf %39, %39 : vector<32x8xf32>
        %cst_33 = arith.constant dense<0.000000e+00> : vector<32xf32>
        %53 = vector.multi_reduction <add>, %52, %cst_33 [1] : vector<32x8xf32> to vector<32xf32>
        %54 = vector.shape_cast %53 : vector<32xf32> to vector<32x1xf32>
        %55 = arith.addf %51, %54 : vector<32x1xf32>
        %c64_34 = arith.constant 64 : index
        %c0_35 = arith.constant 0 : index
        %56 = vector.load %arg10[%c64_34, %c0_35] : memref<112x1xf32, #tpu.memory_space<vmem>>, vector<32x1xf32>
        tpu.vector_store %arg10[%c64_34, %c0_35], %55 {strides = array<i32>} : memref<112x1xf32, #tpu.memory_space<vmem>>, vector<32x1xf32>,
      } else {
      }
      %c2_i32 = arith.constant 2 : i32
      %43 = arith.cmpi sge, %arg0, %c2_i32 : i32
      %44 = arith.extui %43 : i1 to i32
      %c0_i32_25 = arith.constant 0 : i32
      %45 = arith.cmpi ne, %44, %c0_i32_25 : i32
      scf.if %45 {
        %c64_26 = arith.constant 64 : index
        %c0_27 = arith.constant 0 : index
        %46 = vector.load %arg9[%c64_26, %c0_27] : memref<112x1xf32, #tpu.memory_space<vmem>>, vector<32x1xf32>
        %cst_28 = arith.constant 1.250000e-01 : f32
        %47 = vector.broadcast %cst_28 : f32 to vector<32x1xf32>
        %48 = arith.mulf %46, %47 : vector<32x1xf32>
        %c64_29 = arith.constant 64 : index
        %c0_30 = arith.constant 0 : index
        %49 = vector.load %arg10[%c64_29, %c0_30] : memref<112x1xf32, #tpu.memory_space<vmem>>, vector<32x1xf32>
        %cst_31 = arith.constant 1.250000e-01 : f32
        %50 = vector.broadcast %cst_31 : f32 to vector<32x1xf32>
        %51 = arith.mulf %49, %50 : vector<32x1xf32>
        %52 = arith.mulf %48, %48 : vector<32x1xf32>
        %53 = arith.subf %51, %52 : vector<32x1xf32>
        %cst_32 = arith.constant 0.000000e+00 : f32
        %54 = vector.broadcast %cst_32 : f32 to vector<32x1xf32>
        %55 = arith.maximumf %53, %54 : vector<32x1xf32>
        %c128 = arith.constant 128 : index
        %c0_33 = arith.constant 0 : index
        %56 = vector.load %arg7[%c128, %c0_33] : memref<232x1xf32, #tpu.memory_space<vmem>>, vector<32x1xf32>
        %c160 = arith.constant 160 : index
        %c0_34 = arith.constant 0 : index
        %57 = vector.load %arg7[%c160, %c0_34] : memref<232x1xf32, #tpu.memory_space<vmem>>, vector<32x1xf32>
        %cst_35 = arith.constant 9.99999974E-6 : f32
        %58 = vector.broadcast %cst_35 : f32 to vector<32x1xf32>
        %59 = arith.addf %55, %58 : vector<32x1xf32>
        %60 = math.rsqrt %59 : vector<32x1xf32>
        %61 = arith.mulf %56, %60 : vector<32x1xf32>
        %62 = arith.mulf %48, %61 : vector<32x1xf32>
        %63 = arith.subf %57, %62 : vector<32x1xf32>
        %64 = vector.broadcast %61 : vector<32x1xf32> to vector<32x8xf32>
        %65 = arith.mulf %39, %64 : vector<32x8xf32>
        %66 = vector.broadcast %63 : vector<32x1xf32> to vector<32x8xf32>
        %67 = arith.addf %65, %66 : vector<32x8xf32>
        %cst_36 = arith.constant 0.000000e+00 : f32
        %68 = vector.broadcast %cst_36 : f32 to vector<32x8xf32>
        %69 = arith.maximumf %67, %68 : vector<32x8xf32>
        %c0_37 = arith.constant 0 : index
        %c0_38 = arith.constant 0 : index
        %70 = vector.load %arg5[%c0_37, %c0_38] : memref<16x32xf32, #tpu.memory_space<vmem>>, vector<16x32xf32>
        %cst_39 = arith.constant dense<0.000000e+00> : vector<16x8xf32>
        %71 = tpu.matmul %70, %69, %cst_39 {dimension_numbers = #tpu.dot_dimension_numbers<[1], [0], [0], [1], [0, 0, 1, 1], [], []>} : vector<16x32xf32>, vector<32x8xf32>, vector<16x8xf32> -> vector<16x8xf32>
        %c2_i32_40 = arith.constant 2 : i32
        %72 = arith.cmpi eq, %arg0, %c2_i32_40 : i32
        %73 = arith.extui %72 : i1 to i32
        %c0_i32_41 = arith.constant 0 : i32
        %74 = arith.cmpi ne, %73, %c0_i32_41 : i32
        scf.if %74 {
          %c96 = arith.constant 96 : index
          %c0_43 = arith.constant 0 : index
          %78 = vector.load %arg9[%c96, %c0_43] : memref<112x1xf32, #tpu.memory_space<vmem>>, vector<16x1xf32>
          %cst_44 = arith.constant dense<0.000000e+00> : vector<16xf32>
          %79 = vector.multi_reduction <add>, %71, %cst_44 [1] : vector<16x8xf32> to vector<16xf32>
          %80 = vector.shape_cast %79 : vector<16xf32> to vector<16x1xf32>
          %81 = arith.addf %78, %80 : vector<16x1xf32>
          %c96_45 = arith.constant 96 : index
          %c0_46 = arith.constant 0 : index
          %82 = vector.load %arg9[%c96_45, %c0_46] : memref<112x1xf32, #tpu.memory_space<vmem>>, vector<16x1xf32>
          tpu.vector_store %arg9[%c96_45, %c0_46], %81 {strides = array<i32>} : memref<112x1xf32, #tpu.memory_space<vmem>>, vector<16x1xf32>,
          %c96_47 = arith.constant 96 : index
          %c0_48 = arith.constant 0 : index
          %83 = vector.load %arg10[%c96_47, %c0_48] : memref<112x1xf32, #tpu.memory_space<vmem>>, vector<16x1xf32>
          %84 = arith.mulf %71, %71 : vector<16x8xf32>
          %cst_49 = arith.constant dense<0.000000e+00> : vector<16xf32>
          %85 = vector.multi_reduction <add>, %84, %cst_49 [1] : vector<16x8xf32> to vector<16xf32>
          %86 = vector.shape_cast %85 : vector<16xf32> to vector<16x1xf32>
          %87 = arith.addf %83, %86 : vector<16x1xf32>
          %c96_50 = arith.constant 96 : index
          %c0_51 = arith.constant 0 : index
          %88 = vector.load %arg10[%c96_50, %c0_51] : memref<112x1xf32, #tpu.memory_space<vmem>>, vector<16x1xf32>
          tpu.vector_store %arg10[%c96_50, %c0_51], %87 {strides = array<i32>} : memref<112x1xf32, #tpu.memory_space<vmem>>, vector<16x1xf32>,
        } else {
        }
        %c3_i32 = arith.constant 3 : i32
        %75 = arith.cmpi eq, %arg0, %c3_i32 : i32
        %76 = arith.extui %75 : i1 to i32
        %c0_i32_42 = arith.constant 0 : i32
        %77 = arith.cmpi ne, %76, %c0_i32_42 : i32
        scf.if %77 {
          %c96 = arith.constant 96 : index
          %c0_43 = arith.constant 0 : index
          %78 = vector.load %arg9[%c96, %c0_43] : memref<112x1xf32, #tpu.memory_space<vmem>>, vector<16x1xf32>
          %cst_44 = arith.constant 1.250000e-01 : f32
          %79 = vector.broadcast %cst_44 : f32 to vector<16x1xf32>
          %80 = arith.mulf %78, %79 : vector<16x1xf32>
          %c96_45 = arith.constant 96 : index
          %c0_46 = arith.constant 0 : index
          %81 = vector.load %arg10[%c96_45, %c0_46] : memref<112x1xf32, #tpu.memory_space<vmem>>, vector<16x1xf32>
          %cst_47 = arith.constant 1.250000e-01 : f32
          %82 = vector.broadcast %cst_47 : f32 to vector<16x1xf32>
          %83 = arith.mulf %81, %82 : vector<16x1xf32>
          %84 = arith.mulf %80, %80 : vector<16x1xf32>
          %85 = arith.subf %83, %84 : vector<16x1xf32>
          %cst_48 = arith.constant 0.000000e+00 : f32
          %86 = vector.broadcast %cst_48 : f32 to vector<16x1xf32>
          %87 = arith.maximumf %85, %86 : vector<16x1xf32>
          %c192 = arith.constant 192 : index
          %c0_49 = arith.constant 0 : index
          %88 = vector.load %arg7[%c192, %c0_49] : memref<232x1xf32, #tpu.memory_space<vmem>>, vector<16x1xf32>
          %c208 = arith.constant 208 : index
          %c0_50 = arith.constant 0 : index
          %89 = vector.load %arg7[%c208, %c0_50] : memref<232x1xf32, #tpu.memory_space<vmem>>, vector<16x1xf32>
          %cst_51 = arith.constant 9.99999974E-6 : f32
          %90 = vector.broadcast %cst_51 : f32 to vector<16x1xf32>
          %91 = arith.addf %87, %90 : vector<16x1xf32>
          %92 = math.rsqrt %91 : vector<16x1xf32>
          %93 = arith.mulf %88, %92 : vector<16x1xf32>
          %94 = arith.mulf %80, %93 : vector<16x1xf32>
          %95 = arith.subf %89, %94 : vector<16x1xf32>
          %96 = vector.broadcast %93 : vector<16x1xf32> to vector<16x8xf32>
          %97 = arith.mulf %71, %96 : vector<16x8xf32>
          %98 = vector.broadcast %95 : vector<16x1xf32> to vector<16x8xf32>
          %99 = arith.addf %97, %98 : vector<16x8xf32>
          %cst_52 = arith.constant 0.000000e+00 : f32
          %100 = vector.broadcast %cst_52 : f32 to vector<16x8xf32>
          %101 = arith.maximumf %99, %100 : vector<16x8xf32>
          %c224 = arith.constant 224 : index
          %c0_53 = arith.constant 0 : index
          %102 = vector.load %arg7[%c224, %c0_53] : memref<232x1xf32, #tpu.memory_space<vmem>>, vector<1x1xf32>
          %c0_54 = arith.constant 0 : index
          %c0_55 = arith.constant 0 : index
          %103 = vector.load %arg6[%c0_54, %c0_55] : memref<16x1xf32, #tpu.memory_space<vmem>>, vector<16x1xf32>
          %104 = vector.broadcast %103 : vector<16x1xf32> to vector<16x8xf32>
          %105 = arith.mulf %101, %104 : vector<16x8xf32>
          %cst_56 = arith.constant dense<0.000000e+00> : vector<8xf32>
          %106 = vector.multi_reduction <add>, %105, %cst_56 [0] : vector<16x8xf32> to vector<8xf32>
          %107 = vector.shape_cast %106 : vector<8xf32> to vector<1x8xf32>
          %108 = vector.broadcast %102 : vector<1x1xf32> to vector<1x8xf32>
          %109 = arith.addf %107, %108 : vector<1x8xf32>
          %c0_57 = arith.constant 0 : index
          %c0_58 = arith.constant 0 : index
          %110 = vector.load %arg8[%c0_57, %c0_58] : memref<1x8xf32, #tpu.memory_space<vmem>>, vector<1x8xf32>
          tpu.vector_store %arg8[%c0_57, %c0_58], %109 {strides = array<i32>} : memref<1x8xf32, #tpu.memory_space<vmem>>, vector<1x8xf32>,
        } else {
        }
      } else {
      }
    } else {
    }
    return
  }
  func.func @transform_0(%arg0: i32, %arg1: i32) -> (i32, i32) {
    %c0_i32 = arith.constant 0 : i32
    %c0_i32_0 = arith.constant 0 : i32
    return %arg1, %c0_i32 : i32, i32
  }
  func.func @transform_1(%arg0: i32, %arg1: i32) -> (i32, i32) {
    %c0_i32 = arith.constant 0 : i32
    %c0_i32_0 = arith.constant 0 : i32
    %c0_i32_1 = arith.constant 0 : i32
    return %c0_i32, %c0_i32_0 : i32, i32
  }
  func.func @transform_2(%arg0: i32, %arg1: i32) -> (i32, i32) {
    %c0_i32 = arith.constant 0 : i32
    %c0_i32_0 = arith.constant 0 : i32
    %c0_i32_1 = arith.constant 0 : i32
    return %c0_i32, %c0_i32_0 : i32, i32
  }
  func.func @transform_3(%arg0: i32, %arg1: i32) -> (i32, i32) {
    %c0_i32 = arith.constant 0 : i32
    %c0_i32_0 = arith.constant 0 : i32
    %c0_i32_1 = arith.constant 0 : i32
    return %c0_i32, %c0_i32_0 : i32, i32
  }
  func.func @transform_4(%arg0: i32, %arg1: i32) -> (i32, i32) {
    %c0_i32 = arith.constant 0 : i32
    %c0_i32_0 = arith.constant 0 : i32
    %c0_i32_1 = arith.constant 0 : i32
    return %c0_i32, %c0_i32_0 : i32, i32
  }
  func.func @transform_5(%arg0: i32, %arg1: i32) -> (i32, i32) {
    %c0_i32 = arith.constant 0 : i32
    %c0_i32_0 = arith.constant 0 : i32
    %c0_i32_1 = arith.constant 0 : i32
    return %c0_i32, %c0_i32_0 : i32, i32
  }
  func.func @transform_6(%arg0: i32, %arg1: i32) -> (i32, i32) {
    %c0_i32 = arith.constant 0 : i32
    %c0_i32_0 = arith.constant 0 : i32
    return %c0_i32, %arg1 : i32, i32
  }
}

</mosaic_0001>

<llo_original>
// kernel: discriminator_z.1
$region0: #{discriminator_z.1}
  #allocation0 [shape = 'u32[]', space=smem, size = 0x4, offset = 0x4, fixed_abs, tag = 'smem constant byte address 0x4 - core index']
  #allocation1 [shape = 'u32[144,128]{1,0:T(1,128)}', space=vmem, size = 0x12000, scoped, tag = 'internal scratch']
  #allocation2 [shape = 'f32[112,1]{1,0:T(8,128)}', space=vmem, size = 0xe000, scoped, tag = 'scratch operand']
  #allocation3 [shape = 'f32[112,1]{1,0:T(8,128)}', space=vmem, size = 0xe000, scoped, tag = 'scratch operand']
  %s0 = inlined_call_operand.vmem [shape: f32[8,50], index: 0, kind: input, shape index: {}]
  %s1 = inlined_call_operand.vmem [shape: f32[64,50], index: 1, kind: input, shape index: {}]
  %s2 = inlined_call_operand.vmem [shape: f32[32,64], index: 2, kind: input, shape index: {}]
  %s3 = inlined_call_operand.vmem [shape: f32[16,32], index: 3, kind: input, shape index: {}]
  %s4 = inlined_call_operand.vmem [shape: f32[16,1], index: 4, kind: input, shape index: {}]
  %s5 = inlined_call_operand.vmem [shape: f32[232,1], index: 5, kind: input, shape index: {}]
  %s6 = inlined_call_operand.hbm [shape: f32[1,8], index: 6, kind: output, shape index: {}]
  %s7 = sld [smem:[#allocation0]]
  $region85: #{discriminator_z.1} parent=0
    _
  %s9 = ssub.s32 1, %s7
  %s10 = scalar_select 0, %s9, %s7
  $region1: #{discriminator_z.1} parent=0
    #allocation4 [shape = 'u8[512]{0}', space=vmem, size = 0x400, scoped, tag = 'output window, operand 0, single buffered']
    #allocation5 [shape = 's32[2]{0}', space=sflag, size = 0x8, scoped, tag = 'scoped memory for discriminator_z.1']
    %11 = vsyncpa [#allocation5], 0
    loop: start=0, step=1, limit=6
    $region2: #{discriminator_z.1} parent=1 // loop_pre_header
      _
    $region3: #{discriminator_z.1} parent=1 // loop_header
      %s13 = sphi 0, %s17
      %p14 = scmp.ge.s32.totalorder %s13, 6
      %s20 = sphi 0, %s32
      %s21 = sphi 0, %s28
      %s22 = sphi 0, %s20
      %s23 = sphi 0, %s21
      %s24 = sphi 0, %s22
      %s25 = sphi 0, %s23
      %s35 = sphi 0, %s37
      %s38 = sphi 0, %s35
      %s39 = sphi 0, %s38
      %s55 = sphi 0, %s39
      %s59 = sphi 0, %s59
      %s61 = sphi 0, %s59
      %s62 = sphi 0, %s61
      %s76 = sphi 0, %s62
      %s80 = sphi 0, %s80
      %s82 = sphi 0, %s80
      %s83 = sphi 0, %s82
      %s97 = sphi 0, %s83
      %s101 = sphi 0, %s101
      %s103 = sphi 0, %s101
      %s104 = sphi 0, %s103
      %s118 = sphi 0, %s104
      %s122 = sphi 0, %s122
      %s124 = sphi 0, %s122
      %s125 = sphi 0, %s124
      %s139 = sphi 0, %s125
      %s143 = sphi 0, %s143
      %s145 = sphi 0, %s143
      %s146 = sphi 0, %s145
      %s160 = sphi 0, %s146
      %s166 = sphi 0, %s168
      %s169 = sphi 0, %s166
      %s170 = sphi 0, %s169
      %s186 = sphi 0, %s170
    $region4: #{discriminator_z.1} parent=1 // loop_header_branch
      %16 = sbr.rel (%p14) target = $region8
    $region5: #{discriminator_z.1} parent=1 // loop_body
      %s18 = ssub.s32 %s13, 1
      %s19 = ssub.s32 %s13, 2
      %s26 = sadd.s32 1, %s21
      %p27 = scmp.ge.s32.totalorder %s26, 1
      %s28 = scalar_select %p27, 0, %s26
      %s29 = sadd.s32 1, %s20
      %s30 = scalar_select %p27, %s29, %s20
      %p31 = scmp.ge.s32.totalorder %s30, 4
      %s32 = scalar_select %p31, 0, %s30
      %s33 = ssub.s32 %s21, %s28
      %p34 = scmp.eq.s32.totalorder %s33, 0
      %s36 = sadd.s32 %s35, 1
      %s37 = scalar_select %p34, %s35, %s36
      %p40 = pneg %p34
      %p41 = scmp.eq.s32.totalorder %s13, 3
      %p42 = por %p40, %p41
      %p43 = scmp.ne.s32.totalorder %s35, %s38
      %p44 = scmp.eq.s32.totalorder %s13, 0
      %p45 = por %p43, %p44
      %p46 = scmp.ne.s32.totalorder %s35, %s38
      %p47 = scmp.eq.s32.totalorder %s18, 3
      %p48 = por %p46, %p47
      %p49 = scmp.ne.s32.totalorder %s38, %s39
      %p50 = scmp.eq.s32.totalorder %s18, 0
      %p51 = por %p49, %p50
      %p52 = scmp.ne.s32.totalorder %s38, %s39
      %p53 = scmp.eq.s32.totalorder %s19, 3
      %p54 = por %p52, %p53
      %p56 = scmp.ne.s32.totalorder %s39, %s55
      %p57 = scmp.eq.s32.totalorder %s19, 0
      %p58 = por %p56, %p57
      %s60 = sadd.s32 %s59, 1
      %p63 = scmp.eq.s32.totalorder %s13, 3
      %p64 = scmp.ne.s32.totalorder %s59, %s61
      %p65 = scmp.eq.s32.totalorder %s13, 0
      %p66 = por %p64, %p65
      %p67 = scmp.ne.s32.totalorder %s59, %s61
      %p68 = scmp.eq.s32.totalorder %s18, 3
      %p69 = por %p67, %p68
      %p70 = scmp.ne.s32.totalorder %s61, %s62
      %p71 = scmp.eq.s32.totalorder %s18, 0
      %p72 = por %p70, %p71
      %p73 = scmp.ne.s32.totalorder %s61, %s62
      %p74 = scmp.eq.s32.totalorder %s19, 3
      %p75 = por %p73, %p74
      %p77 = scmp.ne.s32.totalorder %s62, %s76
      %p78 = scmp.eq.s32.totalorder %s19, 0
      %p79 = por %p77, %p78
      %s81 = sadd.s32 %s80, 1
      %p84 = scmp.eq.s32.totalorder %s13, 3
      %p85 = scmp.ne.s32.totalorder %s80, %s82
      %p86 = scmp.eq.s32.totalorder %s13, 0
      %p87 = por %p85, %p86
      %p88 = scmp.ne.s32.totalorder %s80, %s82
      %p89 = scmp.eq.s32.totalorder %s18, 3
      %p90 = por %p88, %p89
      %p91 = scmp.ne.s32.totalorder %s82, %s83
      %p92 = scmp.eq.s32.totalorder %s18, 0
      %p93 = por %p91, %p92
      %p94 = scmp.ne.s32.totalorder %s82, %s83
      %p95 = scmp.eq.s32.totalorder %s19, 3
      %p96 = por %p94, %p95
      %p98 = scmp.ne.s32.totalorder %s83, %s97
      %p99 = scmp.eq.s32.totalorder %s19, 0
      %p100 = por %p98, %p99
      %s102 = sadd.s32 %s101, 1
      %p105 = scmp.eq.s32.totalorder %s13, 3
      %p106 = scmp.ne.s32.totalorder %s101, %s103
      %p107 = scmp.eq.s32.totalorder %s13, 0
      %p108 = por %p106, %p107
      %p109 = scmp.ne.s32.totalorder %s101, %s103
      %p110 = scmp.eq.s32.totalorder %s18, 3
      %p111 = por %p109, %p110
      %p112 = scmp.ne.s32.totalorder %s103, %s104
      %p113 = scmp.eq.s32.totalorder %s18, 0
      %p114 = por %p112, %p113
      %p115 = scmp.ne.s32.totalorder %s103, %s104
      %p116 = scmp.eq.s32.totalorder %s19, 3
      %p117 = por %p115, %p116
      %p119 = scmp.ne.s32.totalorder %s104, %s118
      %p120 = scmp.eq.s32.totalorder %s19, 0
      %p121 = por %p119, %p120
      %s123 = sadd.s32 %s122, 1
      %p126 = scmp.eq.s32.totalorder %s13, 3
      %p127 = scmp.ne.s32.totalorder %s122, %s124
      %p128 = scmp.eq.s32.totalorder %s13, 0
      %p129 = por %p127, %p128
      %p130 = scmp.ne.s32.totalorder %s122, %s124
      %p131 = scmp.eq.s32.totalorder %s18, 3
      %p132 = por %p130, %p131
      %p133 = scmp.ne.s32.totalorder %s124, %s125
      %p134 = scmp.eq.s32.totalorder %s18, 0
      %p135 = por %p133, %p134
      %p136 = scmp.ne.s32.totalorder %s124, %s125
      %p137 = scmp.eq.s32.totalorder %s19, 3
      %p138 = por %p136, %p137
      %p140 = scmp.ne.s32.totalorder %s125, %s139
      %p141 = scmp.eq.s32.totalorder %s19, 0
      %p142 = por %p140, %p141
      %s144 = sadd.s32 %s143, 1
      %p147 = scmp.eq.s32.totalorder %s13, 3
      %p148 = scmp.ne.s32.totalorder %s143, %s145
      %p149 = scmp.eq.s32.totalorder %s13, 0
      %p150 = por %p148, %p149
      %p151 = scmp.ne.s32.totalorder %s143, %s145
      %p152 = scmp.eq.s32.totalorder %s18, 3
      %p153 = por %p151, %p152
      %p154 = scmp.ne.s32.totalorder %s145, %s146
      %p155 = scmp.eq.s32.totalorder %s18, 0
      %p156 = por %p154, %p155
      %p157 = scmp.ne.s32.totalorder %s145, %s146
      %p158 = scmp.eq.s32.totalorder %s19, 3
      %p159 = por %p157, %p158
      %p161 = scmp.ne.s32.totalorder %s146, %s160
      %p162 = scmp.eq.s32.totalorder %s19, 0
      %p163 = por %p161, %p162
      %s164 = ssub.s32 %s21, %s28
      %p165 = scmp.eq.s32.totalorder %s164, 0
      %s167 = sadd.s32 %s166, 1
      %s168 = scalar_select %p165, %s166, %s167
      %p171 = pneg %p165
      %p172 = scmp.eq.s32.totalorder %s13, 3
      %p173 = por %p171, %p172
      %p174 = scmp.ne.s32.totalorder %s166, %s169
      %p175 = scmp.eq.s32.totalorder %s13, 0
      %p176 = por %p174, %p175
      %p177 = scmp.ne.s32.totalorder %s166, %s169
      %p178 = scmp.eq.s32.totalorder %s18, 3
      %p179 = por %p177, %p178
      %p180 = scmp.ne.s32.totalorder %s169, %s170
      %p181 = scmp.eq.s32.totalorder %s18, 0
      %p182 = por %p180, %p181
      %p183 = scmp.ne.s32.totalorder %s169, %s170
      %p184 = scmp.eq.s32.totalorder %s19, 3
      %p185 = por %p183, %p184
      %p187 = scmp.ne.s32.totalorder %s170, %s186
      %p188 = scmp.eq.s32.totalorder %s19, 0
      %p189 = por %p187, %p188
      %p190 = scmp.le.s32.totalorder 1, %s13
      %p191 = scmp.lt.s32.totalorder %s13, 5
      %p192 = pnand %p190, %p191
      %p193 = pneg %p192
      // Predicated region
      $region9: #{discriminator_z.1} parent=5 // pred_check
        _
      $region10: #{discriminator_z.1} parent=5 // pred_check_branch
        %195 = sbr.rel (%p192) target = $region12
      $region11: #{discriminator_z.1} parent=5 // pred_region
        %s196 = ssub.s32 %s13, 1
        // Predicated region
        $region13: #{discriminator_z.1} parent=11 // pred_check
          %p197 = pneg %p51
        $region14: #{discriminator_z.1} parent=11 // pred_check_branch
          %199 = sbr.rel (%p197) target = $region16
        $region15: #{discriminator_z.1} parent=11 // pred_region
          %p200 = scmp.lt.s32.totalorder %s23, 0
          %s201 = scalar_select %p200, %s23, 0
          %s202 = smul.addr %s201, 8
          %s203 = scalar_lea.vmem %s0, %s202
        $region16: #{discriminator_z.1} parent=11 // pred_fallthru
          _
        // Predicated region
        $region17: #{discriminator_z.1} parent=11 // pred_check
          %p204 = pneg %p72
        $region18: #{discriminator_z.1} parent=11 // pred_check_branch
          %206 = sbr.rel (%p204) target = $region20
        $region19: #{discriminator_z.1} parent=11 // pred_region
          _
        $region20: #{discriminator_z.1} parent=11 // pred_fallthru
          _
        // Predicated region
        $region21: #{discriminator_z.1} parent=11 // pred_check
          %p207 = pneg %p93
        $region22: #{discriminator_z.1} parent=11 // pred_check_branch
          %209 = sbr.rel (%p207) target = $region24
        $region23: #{discriminator_z.1} parent=11 // pred_region
          _
        $region24: #{discriminator_z.1} parent=11 // pred_fallthru
          _
        // Predicated region
        $region25: #{discriminator_z.1} parent=11 // pred_check
          %p210 = pneg %p114
        $region26: #{discriminator_z.1} parent=11 // pred_check_branch
          %212 = sbr.rel (%p210) target = $region28
        $region27: #{discriminator_z.1} parent=11 // pred_region
          _
        $region28: #{discriminator_z.1} parent=11 // pred_fallthru
          _
        // Predicated region
        $region29: #{discriminator_z.1} parent=11 // pred_check
          %p213 = pneg %p135
        $region30: #{discriminator_z.1} parent=11 // pred_check_branch
          %215 = sbr.rel (%p213) target = $region32
        $region31: #{discriminator_z.1} parent=11 // pred_region
          _
        $region32: #{discriminator_z.1} parent=11 // pred_fallthru
          _
        // Predicated region
        $region33: #{discriminator_z.1} parent=11 // pred_check
          %p216 = pneg %p156
        $region34: #{discriminator_z.1} parent=11 // pred_check_branch
          %218 = sbr.rel (%p216) target = $region36
        $region35: #{discriminator_z.1} parent=11 // pred_region
          _
        $region36: #{discriminator_z.1} parent=11 // pred_fallthru
          _
      $region12: #{discriminator_z.1} parent=5 // pred_fallthru
        _
      %p219 = scmp.lt.s32.totalorder %s13, 4
      // Predicated region
      $region37: #{discriminator_z.1} parent=5 // pred_check
        %p220 = pneg %p219
      $region38: #{discriminator_z.1} parent=5 // pred_check_branch
        %222 = sbr.rel (%p220) target = $region40
      $region39: #{discriminator_z.1} parent=5 // pred_region
        _
      $region40: #{discriminator_z.1} parent=5 // pred_fallthru
        _
      %p223 = scmp.le.s32.totalorder 1, %s13
      %p224 = scmp.lt.s32.totalorder %s13, 5
      %p225 = pnand %p223, %p224
      %p226 = pneg %p225
      // Predicated region
      $region41: #{discriminator_z.1} parent=5 // pred_check
        _
      $region42: #{discriminator_z.1} parent=5 // pred_check_branch
        %228 = sbr.rel (%p225) target = $region44
      $region43: #{discriminator_z.1} parent=5 // pred_region
        %s229 = ssub.s32 %s13, 1
        %p230 = scmp.lt.s32.totalorder %s23, 0
        %s231 = scalar_select %p230, %s23, 0
        %s232 = smul.addr %s231, 8
        %s233 = scalar_lea.vmem %s0, %s232
        %p234 = pneg %p51
        %p235 = pneg %p48
        %p236 = pneg %p72
        %p237 = pneg %p69
        %p238 = pneg %p93
        %p239 = pneg %p90
        %p240 = pneg %p114
        %p241 = pneg %p111
        %p242 = pneg %p135
        %p243 = pneg %p132
        %p244 = pneg %p156
        %p245 = pneg %p153
        %p246 = pneg %p182
        %p247 = pneg %p179
        %p248 = scmp.lt.s32.totalorder %s23, 0
        %s249 = scalar_select %p248, %s23, 0
        %s250 = smul.addr %s249, 8
        %s251 = scalar_lea.vmem %s0, %s250
        %p252 = scmp.eq.s32.totalorder %s22, 0
        %p253 = scmp.eq.s32.totalorder %s23, 0
        %p254 = pnand %p252, %p253
        %p255 = pneg %p254
        // Predicated region
        $region45: #{discriminator_z.1} parent=43 // pred_check
          _
        $region46: #{discriminator_z.1} parent=43 // pred_check_branch
          %257 = sbr.rel (%p254) target = $region48
        $region47: #{discriminator_z.1} parent=43 // pred_region
          %vm258 = vcmask 7168
          %259 = vst.msk [vmem:[#allocation2] sm:$0xff] %vm258, 0.0
          %260 = vst.msk [vmem:[#allocation2 + $0x8] sm:$0xff] %vm258, 0.0
          %261 = vst.msk [vmem:[#allocation2 + $0x10] sm:$0xff] %vm258, 0.0
          %262 = vst.msk [vmem:[#allocation2 + $0x18] sm:$0xff] %vm258, 0.0
          %263 = vst.msk [vmem:[#allocation2 + $0x20] sm:$0xff] %vm258, 0.0
          %264 = vst.msk [vmem:[#allocation2 + $0x28] sm:$0xff] %vm258, 0.0
          %265 = vst.msk [vmem:[#allocation2 + $0x30] sm:$0xff] %vm258, 0.0
          %266 = vst.msk [vmem:[#allocation2 + $0x38] sm:$0xff] %vm258, 0.0
          %267 = vst.msk [vmem:[#allocation2 + $0x40] sm:$0xff] %vm258, 0.0
          %268 = vst.msk [vmem:[#allocation2 + $0x48] sm:$0xff] %vm258, 0.0
          %269 = vst.msk [vmem:[#allocation2 + $0x50] sm:$0xff] %vm258, 0.0
          %270 = vst.msk [vmem:[#allocation2 + $0x58] sm:$0xff] %vm258, 0.0
          %271 = vst.msk [vmem:[#allocation2 + $0x60] sm:$0xff] %vm258, 0.0
          %272 = vst.msk [vmem:[#allocation2 + $0x68] sm:$0xff] %vm258, 0.0
          %273 = vst.msk [vmem:[#allocation3] sm:$0xff] %vm258, 0.0
          %274 = vst.msk [vmem:[#allocation3 + $0x8] sm:$0xff] %vm258, 0.0
          %275 = vst.msk [vmem:[#allocation3 + $0x10] sm:$0xff] %vm258, 0.0
          %276 = vst.msk [vmem:[#allocation3 + $0x18] sm:$0xff] %vm258, 0.0
          %277 = vst.msk [vmem:[#allocation3 + $0x20] sm:$0xff] %vm258, 0.0
          %278 = vst.msk [vmem:[#allocation3 + $0x28] sm:$0xff] %vm258, 0.0
          %279 = vst.msk [vmem:[#allocation3 + $0x30] sm:$0xff] %vm258, 0.0
          %280 = vst.msk [vmem:[#allocation3 + $0x38] sm:$0xff] %vm258, 0.0
          %281 = vst.msk [vmem:[#allocation3 + $0x40] sm:$0xff] %vm258, 0.0
          %282 = vst.msk [vmem:[#allocation3 + $0x48] sm:$0xff] %vm258, 0.0
          %283 = vst.msk [vmem:[#allocation3 + $0x50] sm:$0xff] %vm258, 0.0
          %284 = vst.msk [vmem:[#allocation3 + $0x58] sm:$0xff] %vm258, 0.0
          %285 = vst.msk [vmem:[#allocation3 + $0x60] sm:$0xff] %vm258, 0.0
          %286 = vst.msk [vmem:[#allocation3 + $0x68] sm:$0xff] %vm258, 0.0
        $region48: #{discriminator_z.1} parent=43 // pred_fallthru
          _
        %v287 = vld [vmem:[%s1] sm:$0xff]
        %v288 = vld [vmem:[%s1 + $0x8] sm:$0xff]
        %v289 = vld [vmem:[%s1 + $0x10] sm:$0xff]
        %v290 = vld [vmem:[%s1 + $0x18] sm:$0xff]
        %v291 = vld [vmem:[%s1 + $0x20] sm:$0xff]
        %v292 = vld [vmem:[%s1 + $0x28] sm:$0xff]
        %v293 = vld [vmem:[%s1 + $0x30] sm:$0xff]
        %v294 = vld [vmem:[%s1 + $0x38] sm:$0xff]
        %v295 = vld [vmem:[%s251] sm:$0xff]
        %vm296 = vcmask 408576
        %v298 = vsel %vm296, %v287, 0
        %v301 = vsel %vm296, %v288, 0
        %v304 = vsel %vm296, %v289, 0
        %v307 = vsel %vm296, %v290, 0
        %v310 = vsel %vm296, %v291, 0
        %v313 = vsel %vm296, %v292, 0
        %v316 = vsel %vm296, %v293, 0
        %v319 = vsel %vm296, %v294, 0
        %v322 = vsel %vm296, %v295, 0
        %324 = vmatprep.subr.mxu0 0.0
        %325 = vmatpush1.xpose.msra.mxu0 %v322
        %326 = vmatprep.subr.mxu0 0.0
        %327 = vmatpush1.xpose.msra.mxu0 0.0
        %328 = vmatprep.subr.mxu0 0.0
        %329 = vmatpush1.xpose.msra.mxu0 0.0
        %330 = vmatprep.subr.mxu0 0.0
        %331 = vmatpush1.xpose.msra.mxu0 0.0
        %332 = vmatprep.subr.mxu0 0.0
        %333 = vmatpush1.xpose.msra.mxu0 0.0
        %334 = vmatprep.subr.mxu0 0.0
        %335 = vmatpush1.xpose.msra.mxu0 0.0
        %336 = vmatprep.subr.mxu0 0.0
        %337 = vmatpush1.xpose.msra.mxu0 0.0
        %338 = vmatprep.subr.mxu0 0.0
        %339 = vmatpush1.xpose.msra.mxu0 0.0
        %340 = vmatprep.subr.mxu0 0.0
        %341 = vmatpush1.xpose.msra.mxu0 0.0
        %342 = vmatprep.subr.mxu0 0.0
        %343 = vmatpush1.xpose.msra.mxu0 0.0
        %344 = vmatprep.subr.mxu0 0.0
        %345 = vmatpush1.xpose.msra.mxu0 0.0
        %346 = vmatprep.subr.mxu0 0.0
        %347 = vmatpush1.xpose.msra.mxu0 0.0
        %348 = vmatprep.subr.mxu0 0.0
        %349 = vmatpush1.xpose.msra.mxu0 0.0
        %350 = vmatprep.subr.mxu0 0.0
        %351 = vmatpush1.xpose.msra.mxu0 0.0
        %352 = vmatprep.subr.mxu0 0.0
        %353 = vmatpush1.xpose.msra.mxu0 0.0
        %354 = vmatprep.subr.mxu0 0.0
        %355 = vmatpush1.xpose.msra.mxu0 0.0
        %356 = vmatprep.subr.mxu0 0.0
        %357 = vmatpush1.xpose.msra.mxu0 0.0
        %358 = vmatprep.subr.mxu0 0.0
        %359 = vmatpush1.xpose.msra.mxu0 0.0
        %360 = vmatprep.subr.mxu0 0.0
        %361 = vmatpush1.xpose.msra.mxu0 0.0
        %362 = vmatprep.subr.mxu0 0.0
        %363 = vmatpush1.xpose.msra.mxu0 0.0
        %364 = vmatprep.subr.mxu0 0.0
        %365 = vmatpush1.xpose.msra.mxu0 0.0
        %366 = vmatprep.subr.mxu0 0.0
        %367 = vmatpush1.xpose.msra.mxu0 0.0
        %368 = vmatprep.subr.mxu0 0.0
        %369 = vmatpush1.xpose.msra.mxu0 0.0
        %370 = vmatprep.subr.mxu0 0.0
        %371 = vmatpush1.xpose.msra.mxu0 0.0
        %372 = vmatprep.subr.mxu0 0.0
        %373 = vmatpush1.xpose.msra.mxu0 0.0
        %374 = vmatprep.subr.mxu0 0.0
        %375 = vmatpush1.xpose.msra.mxu0 0.0
        %376 = vmatprep.subr.mxu0 0.0
        %377 = vmatpush1.xpose.msra.mxu0 0.0
        %378 = vmatprep.subr.mxu0 0.0
        %379 = vmatpush1.xpose.msra.mxu0 0.0
        %380 = vmatprep.subr.mxu0 0.0
        %381 = vmatpush1.xpose.msra.mxu0 0.0
        %382 = vmatprep.subr.mxu0 0.0
        %383 = vmatpush1.xpose.msra.mxu0 0.0
        %384 = vmatprep.subr.mxu0 0.0
        %385 = vmatpush1.xpose.msra.mxu0 0.0
        %386 = vmatprep.subr.mxu0 0.0
        %387 = vmatpush1.xpose.msra.mxu0 0.0
        %388 = vmatprep.mubr.f32.mxu0 0.0
        %389 = vmatmul.mubr.f32.gmra.mrb[0].mxu0 %v298
        %v390 = vpop.f32.mrb[0].mxu0
        %v391 = vadd.f32 0.0, %v390
        %v392 = vpop.f32.mrb[0].mxu0
        %393 = vmatprep.mubr.f32.mxu0 0.0
        %394 = vmatmul.mubr.f32.gmra.mrb[0].mxu0 %v301
        %v395 = vpop.f32.mrb[0].mxu0
        %v396 = vadd.f32 0.0, %v395
        %v397 = vpop.f32.mrb[0].mxu0
        %398 = vmatprep.mubr.f32.mxu0 0.0
        %399 = vmatmul.mubr.f32.gmra.mrb[0].mxu0 %v304
        %v400 = vpop.f32.mrb[0].mxu0
        %v401 = vadd.f32 0.0, %v400
        %v402 = vpop.f32.mrb[0].mxu0
        %403 = vmatprep.mubr.f32.mxu0 0.0
        %404 = vmatmul.mubr.f32.gmra.mrb[0].mxu0 %v307
        %v405 = vpop.f32.mrb[0].mxu0
        %v406 = vadd.f32 0.0, %v405
        %v407 = vpop.f32.mrb[0].mxu0
        %408 = vmatprep.mubr.f32.mxu0 0.0
        %409 = vmatmul.mubr.f32.gmra.mrb[0].mxu0 %v310
        %v410 = vpop.f32.mrb[0].mxu0
        %v411 = vadd.f32 0.0, %v410
        %v412 = vpop.f32.mrb[0].mxu0
        %413 = vmatprep.mubr.f32.mxu0 0.0
        %414 = vmatmul.mubr.f32.gmra.mrb[0].mxu0 %v313
        %v415 = vpop.f32.mrb[0].mxu0
        %v416 = vadd.f32 0.0, %v415
        %v417 = vpop.f32.mrb[0].mxu0
        %418 = vmatprep.mubr.f32.mxu0 0.0
        %419 = vmatmul.mubr.f32.gmra.mrb[0].mxu0 %v316
        %v420 = vpop.f32.mrb[0].mxu0
        %v421 = vadd.f32 0.0, %v420
        %v422 = vpop.f32.mrb[0].mxu0
        %423 = vmatprep.mubr.f32.mxu0 0.0
        %424 = vmatmul.mubr.f32.gmra.mrb[0].mxu0 %v319
        %v425 = vpop.f32.mrb[0].mxu0
        %v426 = vadd.f32 0.0, %v425
        %v427 = vpop.f32.mrb[0].mxu0
        %428 = vdwg.mxu0
        // Predicated region
        $region49: #{discriminator_z.1} parent=43 // pred_check
          %p429 = pneg %p252
        $region50: #{discriminator_z.1} parent=43 // pred_check_branch
          %431 = sbr.rel (%p429) target = $region52
        $region51: #{discriminator_z.1} parent=43 // pred_region
          %v432 = vld [vmem:[#allocation2] sm:$0xff]
          %v433 = vld [vmem:[#allocation2 + $0x8] sm:$0xff]
          %v434 = vld [vmem:[#allocation2 + $0x10] sm:$0xff]
          %v435 = vld [vmem:[#allocation2 + $0x18] sm:$0xff]
          %v436 = vld [vmem:[#allocation2 + $0x20] sm:$0xff]
          %v437 = vld [vmem:[#allocation2 + $0x28] sm:$0xff]
          %v438 = vld [vmem:[#allocation2 + $0x30] sm:$0xff]
          %v439 = vld [vmem:[#allocation2 + $0x38] sm:$0xff]
          %vm440 = vcmask 64512
          %v441 = vsel %vm440, %v391, 0.0
          %442 = vadd.xlane.f32.xlu0 %v441
          %v443 = vpop.xlane.xlu0 %442
          %v444 = vsel %vm440, %v396, 0.0
          %445 = vadd.xlane.f32.xlu0 %v444
          %v446 = vpop.xlane.xlu0 %445
          %v447 = vsel %vm440, %v401, 0.0
          %448 = vadd.xlane.f32.xlu0 %v447
          %v449 = vpop.xlane.xlu0 %448
          %v450 = vsel %vm440, %v406, 0.0
          %451 = vadd.xlane.f32.xlu0 %v450
          %v452 = vpop.xlane.xlu0 %451
          %v453 = vsel %vm440, %v411, 0.0
          %454 = vadd.xlane.f32.xlu0 %v453
          %v455 = vpop.xlane.xlu0 %454
          %v456 = vsel %vm440, %v416, 0.0
          %457 = vadd.xlane.f32.xlu0 %v456
          %v458 = vpop.xlane.xlu0 %457
          %v459 = vsel %vm440, %v421, 0.0
          %460 = vadd.xlane.f32.xlu0 %v459
          %v461 = vpop.xlane.xlu0 %460
          %v462 = vsel %vm440, %v426, 0.0
          %463 = vadd.xlane.f32.xlu0 %v462
          %v464 = vpop.xlane.xlu0 %463
          %v465 = vadd.f32 %v432, %v443
          %v466 = vadd.f32 %v433, %v446
          %v467 = vadd.f32 %v434, %v449
          %v468 = vadd.f32 %v435, %v452
          %v469 = vadd.f32 %v436, %v455
          %v470 = vadd.f32 %v437, %v458
          %v471 = vadd.f32 %v438, %v461
          %v472 = vadd.f32 %v439, %v464
          %vm473 = vcmask 7168
          %474 = vst.msk [vmem:[#allocation2] sm:$0xff] %vm473, %v465
          %475 = vst.msk [vmem:[#allocation2 + $0x8] sm:$0xff] %vm473, %v466
          %476 = vst.msk [vmem:[#allocation2 + $0x10] sm:$0xff] %vm473, %v467
          %477 = vst.msk [vmem:[#allocation2 + $0x18] sm:$0xff] %vm473, %v468
          %478 = vst.msk [vmem:[#allocation2 + $0x20] sm:$0xff] %vm473, %v469
          %479 = vst.msk [vmem:[#allocation2 + $0x28] sm:$0xff] %vm473, %v470
          %480 = vst.msk [vmem:[#allocation2 + $0x30] sm:$0xff] %vm473, %v471
          %481 = vst.msk [vmem:[#allocation2 + $0x38] sm:$0xff] %vm473, %v472
          %v482 = vld [vmem:[#allocation3] sm:$0xff]
          %v483 = vld [vmem:[#allocation3 + $0x8] sm:$0xff]
          %v484 = vld [vmem:[#allocation3 + $0x10] sm:$0xff]
          %v485 = vld [vmem:[#allocation3 + $0x18] sm:$0xff]
          %v486 = vld [vmem:[#allocation3 + $0x20] sm:$0xff]
          %v487 = vld [vmem:[#allocation3 + $0x28] sm:$0xff]
          %v488 = vld [vmem:[#allocation3 + $0x30] sm:$0xff]
          %v489 = vld [vmem:[#allocation3 + $0x38] sm:$0xff]
          %v490 = vmul.f32 %v391, %v391
          %v491 = vmul.f32 %v396, %v396
          %v492 = vmul.f32 %v401, %v401
          %v493 = vmul.f32 %v406, %v406
          %v494 = vmul.f32 %v411, %v411
          %v495 = vmul.f32 %v416, %v416
          %v496 = vmul.f32 %v421, %v421
          %v497 = vmul.f32 %v426, %v426
          %v498 = vsel %vm440, %v490, 0.0
          %499 = vadd.xlane.f32.xlu0 %v498
          %v500 = vpop.xlane.xlu0 %499
          %v501 = vsel %vm440, %v491, 0.0
          %502 = vadd.xlane.f32.xlu0 %v501
          %v503 = vpop.xlane.xlu0 %502
          %v504 = vsel %vm440, %v492, 0.0
          %505 = vadd.xlane.f32.xlu0 %v504
          %v506 = vpop.xlane.xlu0 %505
          %v507 = vsel %vm440, %v493, 0.0
          %508 = vadd.xlane.f32.xlu0 %v507
          %v509 = vpop.xlane.xlu0 %508
          %v510 = vsel %vm440, %v494, 0.0
          %511 = vadd.xlane.f32.xlu0 %v510
          %v512 = vpop.xlane.xlu0 %511
          %v513 = vsel %vm440, %v495, 0.0
          %514 = vadd.xlane.f32.xlu0 %v513
          %v515 = vpop.xlane.xlu0 %514
          %v516 = vsel %vm440, %v496, 0.0
          %517 = vadd.xlane.f32.xlu0 %v516
          %v518 = vpop.xlane.xlu0 %517
          %v519 = vsel %vm440, %v497, 0.0
          %520 = vadd.xlane.f32.xlu0 %v519
          %v521 = vpop.xlane.xlu0 %520
          %v522 = vadd.f32 %v482, %v500
          %v523 = vadd.f32 %v483, %v503
          %v524 = vadd.f32 %v484, %v506
          %v525 = vadd.f32 %v485, %v509
          %v526 = vadd.f32 %v486, %v512
          %v527 = vadd.f32 %v487, %v515
          %v528 = vadd.f32 %v488, %v518
          %v529 = vadd.f32 %v489, %v521
          %530 = vst.msk [vmem:[#allocation3] sm:$0xff] %vm473, %v522
          %531 = vst.msk [vmem:[#allocation3 + $0x8] sm:$0xff] %vm473, %v523
          %532 = vst.msk [vmem:[#allocation3 + $0x10] sm:$0xff] %vm473, %v524
          %533 = vst.msk [vmem:[#allocation3 + $0x18] sm:$0xff] %vm473, %v525
          %534 = vst.msk [vmem:[#allocation3 + $0x20] sm:$0xff] %vm473, %v526
          %535 = vst.msk [vmem:[#allocation3 + $0x28] sm:$0xff] %vm473, %v527
          %536 = vst.msk [vmem:[#allocation3 + $0x30] sm:$0xff] %vm473, %v528
          %537 = vst.msk [vmem:[#allocation3 + $0x38] sm:$0xff] %vm473, %v529
        $region52: #{discriminator_z.1} parent=43 // pred_fallthru
          _
        %p538 = scmp.ge.s32.totalorder %s22, 1
        // Predicated region
        $region53: #{discriminator_z.1} parent=43 // pred_check
          %p539 = pneg %p538
        $region54: #{discriminator_z.1} parent=43 // pred_check_branch
          %541 = sbr.rel (%p539) target = $region56
        $region55: #{discriminator_z.1} parent=43 // pred_region
          %v542 = vld [vmem:[#allocation2] sm:$0xff]
          %v543 = vld [vmem:[#allocation2 + $0x8] sm:$0xff]
          %v544 = vld [vmem:[#allocation2 + $0x10] sm:$0xff]
          %v545 = vld [vmem:[#allocation2 + $0x18] sm:$0xff]
          %v546 = vld [vmem:[#allocation2 + $0x20] sm:$0xff]
          %v547 = vld [vmem:[#allocation2 + $0x28] sm:$0xff]
          %v548 = vld [vmem:[#allocation2 + $0x30] sm:$0xff]
          %v549 = vld [vmem:[#allocation2 + $0x38] sm:$0xff]
          %v550 = vmul.f32 %v542, 0.125
          %v551 = vmul.f32 %v543, 0.125
          %v552 = vmul.f32 %v544, 0.125
          %v553 = vmul.f32 %v545, 0.125
          %v554 = vmul.f32 %v546, 0.125
          %v555 = vmul.f32 %v547, 0.125
          %v556 = vmul.f32 %v548, 0.125
          %v557 = vmul.f32 %v549, 0.125
          %v558 = vld [vmem:[#allocation3] sm:$0xff]
          %v559 = vld [vmem:[#allocation3 + $0x8] sm:$0xff]
          %v560 = vld [vmem:[#allocation3 + $0x10] sm:$0xff]
          %v561 = vld [vmem:[#allocation3 + $0x18] sm:$0xff]
          %v562 = vld [vmem:[#allocation3 + $0x20] sm:$0xff]
          %v563 = vld [vmem:[#allocation3 + $0x28] sm:$0xff]
          %v564 = vld [vmem:[#allocation3 + $0x30] sm:$0xff]
          %v565 = vld [vmem:[#allocation3 + $0x38] sm:$0xff]
          %v566 = vmul.f32 %v558, 0.125
          %v567 = vmul.f32 %v559, 0.125
          %v568 = vmul.f32 %v560, 0.125
          %v569 = vmul.f32 %v561, 0.125
          %v570 = vmul.f32 %v562, 0.125
          %v571 = vmul.f32 %v563, 0.125
          %v572 = vmul.f32 %v564, 0.125
          %v573 = vmul.f32 %v565, 0.125
          %v574 = vmul.f32 %v550, %v550
          %v575 = vmul.f32 %v551, %v551
          %v576 = vmul.f32 %v552, %v552
          %v577 = vmul.f32 %v553, %v553
          %v578 = vmul.f32 %v554, %v554
          %v579 = vmul.f32 %v555, %v555
          %v580 = vmul.f32 %v556, %v556
          %v581 = vmul.f32 %v557, %v557
          %v582 = vsub.f32 %v566, %v574
          %v583 = vsub.f32 %v567, %v575
          %v584 = vsub.f32 %v568, %v576
          %v585 = vsub.f32 %v569, %v577
          %v586 = vsub.f32 %v570, %v578
          %v587 = vsub.f32 %v571, %v579
          %v588 = vsub.f32 %v572, %v580
          %v589 = vsub.f32 %v573, %v581
          %v590 = vmax.f32 %v582, 0.0
          %v591 = vmax.f32 %v583, 0.0
          %v592 = vmax.f32 %v584, 0.0
          %v593 = vmax.f32 %v585, 0.0
          %v594 = vmax.f32 %v586, 0.0
          %v595 = vmax.f32 %v587, 0.0
          %v596 = vmax.f32 %v588, 0.0
          %v597 = vmax.f32 %v589, 0.0
          %v598 = vld [vmem:[%s5] sm:$0xff]
          %v599 = vld [vmem:[%s5 + $0x8] sm:$0xff]
          %v600 = vld [vmem:[%s5 + $0x10] sm:$0xff]
          %v601 = vld [vmem:[%s5 + $0x18] sm:$0xff]
          %v602 = vld [vmem:[%s5 + $0x20] sm:$0xff]
          %v603 = vld [vmem:[%s5 + $0x28] sm:$0xff]
          %v604 = vld [vmem:[%s5 + $0x30] sm:$0xff]
          %v605 = vld [vmem:[%s5 + $0x38] sm:$0xff]
          %v606 = vld [vmem:[%s5 + $0x40] sm:$0xff]
          %v607 = vld [vmem:[%s5 + $0x48] sm:$0xff]
          %v608 = vld [vmem:[%s5 + $0x50] sm:$0xff]
          %v609 = vld [vmem:[%s5 + $0x58] sm:$0xff]
          %v610 = vld [vmem:[%s5 + $0x60] sm:$0xff]
          %v611 = vld [vmem:[%s5 + $0x68] sm:$0xff]
          %v612 = vld [vmem:[%s5 + $0x70] sm:$0xff]
          %v613 = vld [vmem:[%s5 + $0x78] sm:$0xff]
          %v614 = vadd.f32 %v590, 1e-05
          %v615 = vadd.f32 %v591, 1e-05
          %v616 = vadd.f32 %v592, 1e-05
          %v617 = vadd.f32 %v593, 1e-05
          %v618 = vadd.f32 %v594, 1e-05
          %v619 = vadd.f32 %v595, 1e-05
          %v620 = vadd.f32 %v596, 1e-05
          %v621 = vadd.f32 %v597, 1e-05
          %v622 = vrsqrt.pop %v614
          %v623 = vrsqrt.pop %v615
          %v624 = vrsqrt.pop %v616
          %v625 = vrsqrt.pop %v617
          %v626 = vrsqrt.pop %v618
          %v627 = vrsqrt.pop %v619
          %v628 = vrsqrt.pop %v620
          %v629 = vrsqrt.pop %v621
          %v630 = vmul.f32 %v598, %v622
          %v631 = vmul.f32 %v599, %v623
          %v632 = vmul.f32 %v600, %v624
          %v633 = vmul.f32 %v601, %v625
          %v634 = vmul.f32 %v602, %v626
          %v635 = vmul.f32 %v603, %v627
          %v636 = vmul.f32 %v604, %v628
          %v637 = vmul.f32 %v605, %v629
          %v638 = vmul.f32 %v550, %v630
          %v639 = vmul.f32 %v551, %v631
          %v640 = vmul.f32 %v552, %v632
          %v641 = vmul.f32 %v553, %v633
          %v642 = vmul.f32 %v554, %v634
          %v643 = vmul.f32 %v555, %v635
          %v644 = vmul.f32 %v556, %v636
          %v645 = vmul.f32 %v557, %v637
          %v646 = vsub.f32 %v606, %v638
          %v647 = vsub.f32 %v607, %v639
          %v648 = vsub.f32 %v608, %v640
          %v649 = vsub.f32 %v609, %v641
          %v650 = vsub.f32 %v610, %v642
          %v651 = vsub.f32 %v611, %v643
          %v652 = vsub.f32 %v612, %v644
          %v653 = vsub.f32 %v613, %v645
          %655 = vset.pattern.permute.xlu0 0
          %656 = vperm.xlu0 %655, %v630
          %v657 = vpop.permute.xlu0 %656
          %660 = vset.pattern.permute.xlu0 0
          %661 = vperm.xlu0 %660, %v631
          %v662 = vpop.permute.xlu0 %661
          %665 = vset.pattern.permute.xlu0 0
          %666 = vperm.xlu0 %665, %v632
          %v667 = vpop.permute.xlu0 %666
          %670 = vset.pattern.permute.xlu0 0
          %671 = vperm.xlu0 %670, %v633
          %v672 = vpop.permute.xlu0 %671
          %675 = vset.pattern.permute.xlu0 0
          %676 = vperm.xlu0 %675, %v634
          %v677 = vpop.permute.xlu0 %676
          %680 = vset.pattern.permute.xlu0 0
          %681 = vperm.xlu0 %680, %v635
          %v682 = vpop.permute.xlu0 %681
          %685 = vset.pattern.permute.xlu0 0
          %686 = vperm.xlu0 %685, %v636
          %v687 = vpop.permute.xlu0 %686
          %690 = vset.pattern.permute.xlu0 0
          %691 = vperm.xlu0 %690, %v637
          %v692 = vpop.permute.xlu0 %691
          %v694 = vmul.f32 %v391, %v657
          %v695 = vmul.f32 %v396, %v662
          %v696 = vmul.f32 %v401, %v667
          %v697 = vmul.f32 %v406, %v672
          %v698 = vmul.f32 %v411, %v677
          %v699 = vmul.f32 %v416, %v682
          %v700 = vmul.f32 %v421, %v687
          %v701 = vmul.f32 %v426, %v692
          %703 = vset.pattern.permute.xlu0 0
          %704 = vperm.xlu0 %703, %v646
          %v705 = vpop.permute.xlu0 %704
          %708 = vset.pattern.permute.xlu0 0
          %709 = vperm.xlu0 %708, %v647
          %v710 = vpop.permute.xlu0 %709
          %713 = vset.pattern.permute.xlu0 0
          %714 = vperm.xlu0 %713, %v648
          %v715 = vpop.permute.xlu0 %714
          %718 = vset.pattern.permute.xlu0 0
          %719 = vperm.xlu0 %718, %v649
          %v720 = vpop.permute.xlu0 %719
          %723 = vset.pattern.permute.xlu0 0
          %724 = vperm.xlu0 %723, %v650
          %v725 = vpop.permute.xlu0 %724
          %728 = vset.pattern.permute.xlu0 0
          %729 = vperm.xlu0 %728, %v651
          %v730 = vpop.permute.xlu0 %729
          %733 = vset.pattern.permute.xlu0 0
          %734 = vperm.xlu0 %733, %v652
          %v735 = vpop.permute.xlu0 %734
          %738 = vset.pattern.permute.xlu0 0
          %739 = vperm.xlu0 %738, %v653
          %v740 = vpop.permute.xlu0 %739
          %v742 = vadd.f32 %v694, %v705
          %v743 = vadd.f32 %v695, %v710
          %v744 = vadd.f32 %v696, %v715
          %v745 = vadd.f32 %v697, %v720
          %v746 = vadd.f32 %v698, %v725
          %v747 = vadd.f32 %v699, %v730
          %v748 = vadd.f32 %v700, %v735
          %v749 = vadd.f32 %v701, %v740
          %v750 = vmax.f32 %v742, 0.0
          %v751 = vmax.f32 %v743, 0.0
          %v752 = vmax.f32 %v744, 0.0
          %v753 = vmax.f32 %v745, 0.0
          %v754 = vmax.f32 %v746, 0.0
          %v755 = vmax.f32 %v747, 0.0
          %v756 = vmax.f32 %v748, 0.0
          %v757 = vmax.f32 %v749, 0.0
          %v758 = vld [vmem:[%s2] sm:$0xff]
          %v759 = vld [vmem:[%s2 + $0x8] sm:$0xff]
          %v760 = vld [vmem:[%s2 + $0x10] sm:$0xff]
          %v761 = vld [vmem:[%s2 + $0x18] sm:$0xff]
          %vm762 = vcmask 523264
          %v764 = vsel %vm762, %v758, 0
          %v767 = vsel %vm762, %v759, 0
          %v770 = vsel %vm762, %v760, 0
          %v773 = vsel %vm762, %v761, 0
          %775 = vmatprep.subr.mxu0 0.0
          %776 = vmatpush1.msra.mxu0 %v750
          %777 = vmatprep.subr.mxu0 0.0
          %778 = vmatpush1.msra.mxu0 %v751
          %779 = vmatprep.subr.mxu0 0.0
          %780 = vmatpush1.msra.mxu0 %v752
          %781 = vmatprep.subr.mxu0 0.0
          %782 = vmatpush1.msra.mxu0 %v753
          %783 = vmatprep.subr.mxu0 0.0
          %784 = vmatpush1.msra.mxu0 %v754
          %785 = vmatprep.subr.mxu0 0.0
          %786 = vmatpush1.msra.mxu0 %v755
          %787 = vmatprep.subr.mxu0 0.0
          %788 = vmatpush1.msra.mxu0 %v756
          %789 = vmatprep.subr.mxu0 0.0
          %790 = vmatpush1.msra.mxu0 %v757
          %791 = vmatprep.subr.mxu0 0.0
          %792 = vmatpush1.msra.mxu0 0.0
          %793 = vmatprep.subr.mxu0 0.0
          %794 = vmatpush1.msra.mxu0 0.0
          %795 = vmatprep.subr.mxu0 0.0
          %796 = vmatpush1.msra.mxu0 0.0
          %797 = vmatprep.subr.mxu0 0.0
          %798 = vmatpush1.msra.mxu0 0.0
          %799 = vmatprep.subr.mxu0 0.0
          %800 = vmatpush1.msra.mxu0 0.0
          %801 = vmatprep.subr.mxu0 0.0
          %802 = vmatpush1.msra.mxu0 0.0
          %803 = vmatprep.subr.mxu0 0.0
          %804 = vmatpush1.msra.mxu0 0.0
          %805 = vmatprep.subr.mxu0 0.0
          %806 = vmatpush1.msra.mxu0 0.0
          %807 = vmatprep.subr.mxu0 0.0
          %808 = vmatpush1.msra.mxu0 0.0
          %809 = vmatprep.subr.mxu0 0.0
          %810 = vmatpush1.msra.mxu0 0.0
          %811 = vmatprep.subr.mxu0 0.0
          %812 = vmatpush1.msra.mxu0 0.0
          %813 = vmatprep.subr.mxu0 0.0
          %814 = vmatpush1.msra.mxu0 0.0
          %815 = vmatprep.subr.mxu0 0.0
          %816 = vmatpush1.msra.mxu0 0.0
          %817 = vmatprep.subr.mxu0 0.0
          %818 = vmatpush1.msra.mxu0 0.0
          %819 = vmatprep.subr.mxu0 0.0
          %820 = vmatpush1.msra.mxu0 0.0
          %821 = vmatprep.subr.mxu0 0.0
          %822 = vmatpush1.msra.mxu0 0.0
          %823 = vmatprep.subr.mxu0 0.0
          %824 = vmatpush1.msra.mxu0 0.0
          %825 = vmatprep.subr.mxu0 0.0
          %826 = vmatpush1.msra.mxu0 0.0
          %827 = vmatprep.subr.mxu0 0.0
          %828 = vmatpush1.msra.mxu0 0.0
          %829 = vmatprep.subr.mxu0 0.0
          %830 = vmatpush1.msra.mxu0 0.0
          %831 = vmatprep.subr.mxu0 0.0
          %832 = vmatpush1.msra.mxu0 0.0
          %833 = vmatprep.subr.mxu0 0.0
          %834 = vmatpush1.msra.mxu0 0.0
          %835 = vmatprep.subr.mxu0 0.0
          %836 = vmatpush1.msra.mxu0 0.0
          %837 = vmatprep.subr.mxu0 0.0
          %838 = vmatpush1.msra.mxu0 0.0
          %839 = vmatprep.mubr.f32.mxu0 0.0
          %840 = vmatmul.mubr.f32.gmra.mrb[0].mxu0 %v764
          %v841 = vpop.f32.mrb[0].mxu0
          %v842 = vadd.f32 0.0, %v841
          %v843 = vpop.f32.mrb[0].mxu0
          %844 = vmatprep.mubr.f32.mxu0 0.0
          %845 = vmatmul.mubr.f32.gmra.mrb[0].mxu0 %v767
          %v846 = vpop.f32.mrb[0].mxu0
          %v847 = vadd.f32 0.0, %v846
          %v848 = vpop.f32.mrb[0].mxu0
          %849 = vmatprep.mubr.f32.mxu0 0.0
          %850 = vmatmul.mubr.f32.gmra.mrb[0].mxu0 %v770
          %v851 = vpop.f32.mrb[0].mxu0
          %v852 = vadd.f32 0.0, %v851
          %v853 = vpop.f32.mrb[0].mxu0
          %854 = vmatprep.mubr.f32.mxu0 0.0
          %855 = vmatmul.mubr.f32.gmra.mrb[0].mxu0 %v773
          %v856 = vpop.f32.mrb[0].mxu0
          %v857 = vadd.f32 0.0, %v856
          %v858 = vpop.f32.mrb[0].mxu0
          %859 = vdwg.mxu0
          %p860 = scmp.eq.s32.totalorder %s22, 1
          // Predicated region
          $region57: #{discriminator_z.1} parent=55 // pred_check
            %p861 = pneg %p860
          $region58: #{discriminator_z.1} parent=55 // pred_check_branch
            %863 = sbr.rel (%p861) target = $region60
          $region59: #{discriminator_z.1} parent=55 // pred_region
            %v864 = vld [vmem:[#allocation2 + $0x40] sm:$0xff]
            %v865 = vld [vmem:[#allocation2 + $0x48] sm:$0xff]
            %v866 = vld [vmem:[#allocation2 + $0x50] sm:$0xff]
            %v867 = vld [vmem:[#allocation2 + $0x58] sm:$0xff]
            %vm868 = vcmask 64512
            %v869 = vsel %vm868, %v842, 0.0
            %870 = vadd.xlane.f32.xlu0 %v869
            %v871 = vpop.xlane.xlu0 %870
            %v872 = vsel %vm868, %v847, 0.0
            %873 = vadd.xlane.f32.xlu0 %v872
            %v874 = vpop.xlane.xlu0 %873
            %v875 = vsel %vm868, %v852, 0.0
            %876 = vadd.xlane.f32.xlu0 %v875
            %v877 = vpop.xlane.xlu0 %876
            %v878 = vsel %vm868, %v857, 0.0
            %879 = vadd.xlane.f32.xlu0 %v878
            %v880 = vpop.xlane.xlu0 %879
            %v881 = vadd.f32 %v864, %v871
            %v882 = vadd.f32 %v865, %v874
            %v883 = vadd.f32 %v866, %v877
            %v884 = vadd.f32 %v867, %v880
            %vm885 = vcmask 7168
            %886 = vst.msk [vmem:[#allocation2 + $0x40] sm:$0xff] %vm885, %v881
            %887 = vst.msk [vmem:[#allocation2 + $0x48] sm:$0xff] %vm885, %v882
            %888 = vst.msk [vmem:[#allocation2 + $0x50] sm:$0xff] %vm885, %v883
            %889 = vst.msk [vmem:[#allocation2 + $0x58] sm:$0xff] %vm885, %v884
            %v890 = vld [vmem:[#allocation3 + $0x40] sm:$0xff]
            %v891 = vld [vmem:[#allocation3 + $0x48] sm:$0xff]
            %v892 = vld [vmem:[#allocation3 + $0x50] sm:$0xff]
            %v893 = vld [vmem:[#allocation3 + $0x58] sm:$0xff]
            %v894 = vmul.f32 %v842, %v842
            %v895 = vmul.f32 %v847, %v847
            %v896 = vmul.f32 %v852, %v852
            %v897 = vmul.f32 %v857, %v857
            %v898 = vsel %vm868, %v894, 0.0
            %899 = vadd.xlane.f32.xlu0 %v898
            %v900 = vpop.xlane.xlu0 %899
            %v901 = vsel %vm868, %v895, 0.0
            %902 = vadd.xlane.f32.xlu0 %v901
            %v903 = vpop.xlane.xlu0 %902
            %v904 = vsel %vm868, %v896, 0.0
            %905 = vadd.xlane.f32.xlu0 %v904
            %v906 = vpop.xlane.xlu0 %905
            %v907 = vsel %vm868, %v897, 0.0
            %908 = vadd.xlane.f32.xlu0 %v907
            %v909 = vpop.xlane.xlu0 %908
            %v910 = vadd.f32 %v890, %v900
            %v911 = vadd.f32 %v891, %v903
            %v912 = vadd.f32 %v892, %v906
            %v913 = vadd.f32 %v893, %v909
            %914 = vst.msk [vmem:[#allocation3 + $0x40] sm:$0xff] %vm885, %v910
            %915 = vst.msk [vmem:[#allocation3 + $0x48] sm:$0xff] %vm885, %v911
            %916 = vst.msk [vmem:[#allocation3 + $0x50] sm:$0xff] %vm885, %v912
            %917 = vst.msk [vmem:[#allocation3 + $0x58] sm:$0xff] %vm885, %v913
          $region60: #{discriminator_z.1} parent=55 // pred_fallthru
            _
          %p918 = scmp.ge.s32.totalorder %s22, 2
          // Predicated region
          $region61: #{discriminator_z.1} parent=55 // pred_check
            %p919 = pneg %p918
          $region62: #{discriminator_z.1} parent=55 // pred_check_branch
            %921 = sbr.rel (%p919) target = $region64
          $region63: #{discriminator_z.1} parent=55 // pred_region
            %v922 = vld [vmem:[#allocation2 + $0x40] sm:$0xff]
            %v923 = vld [vmem:[#allocation2 + $0x48] sm:$0xff]
            %v924 = vld [vmem:[#allocation2 + $0x50] sm:$0xff]
            %v925 = vld [vmem:[#allocation2 + $0x58] sm:$0xff]
            %v926 = vmul.f32 %v922, 0.125
            %v927 = vmul.f32 %v923, 0.125
            %v928 = vmul.f32 %v924, 0.125
            %v929 = vmul.f32 %v925, 0.125
            %v930 = vld [vmem:[#allocation3 + $0x40] sm:$0xff]
            %v931 = vld [vmem:[#allocation3 + $0x48] sm:$0xff]
            %v932 = vld [vmem:[#allocation3 + $0x50] sm:$0xff]
            %v933 = vld [vmem:[#allocation3 + $0x58] sm:$0xff]
            %v934 = vmul.f32 %v930, 0.125
            %v935 = vmul.f32 %v931, 0.125
            %v936 = vmul.f32 %v932, 0.125
            %v937 = vmul.f32 %v933, 0.125
            %v938 = vmul.f32 %v926, %v926
            %v939 = vmul.f32 %v927, %v927
            %v940 = vmul.f32 %v928, %v928
            %v941 = vmul.f32 %v929, %v929
            %v942 = vsub.f32 %v934, %v938
            %v943 = vsub.f32 %v935, %v939
            %v944 = vsub.f32 %v936, %v940
            %v945 = vsub.f32 %v937, %v941
            %v946 = vmax.f32 %v942, 0.0
            %v947 = vmax.f32 %v943, 0.0
            %v948 = vmax.f32 %v944, 0.0
            %v949 = vmax.f32 %v945, 0.0
            %v950 = vld [vmem:[%s5 + $0x80] sm:$0xff]
            %v951 = vld [vmem:[%s5 + $0x88] sm:$0xff]
            %v952 = vld [vmem:[%s5 + $0x90] sm:$0xff]
            %v953 = vld [vmem:[%s5 + $0x98] sm:$0xff]
            %v954 = vld [vmem:[%s5 + $0xa0] sm:$0xff]
            %v955 = vld [vmem:[%s5 + $0xa8] sm:$0xff]
            %v956 = vld [vmem:[%s5 + $0xb0] sm:$0xff]
            %v957 = vld [vmem:[%s5 + $0xb8] sm:$0xff]
            %v958 = vadd.f32 %v946, 1e-05
            %v959 = vadd.f32 %v947, 1e-05
            %v960 = vadd.f32 %v948, 1e-05
            %v961 = vadd.f32 %v949, 1e-05
            %v962 = vrsqrt.pop %v958
            %v963 = vrsqrt.pop %v959
            %v964 = vrsqrt.pop %v960
            %v965 = vrsqrt.pop %v961
            %v966 = vmul.f32 %v950, %v962
            %v967 = vmul.f32 %v951, %v963
            %v968 = vmul.f32 %v952, %v964
            %v969 = vmul.f32 %v953, %v965
            %v970 = vmul.f32 %v926, %v966
            %v971 = vmul.f32 %v927, %v967
            %v972 = vmul.f32 %v928, %v968
            %v973 = vmul.f32 %v929, %v969
            %v974 = vsub.f32 %v954, %v970
            %v975 = vsub.f32 %v955, %v971
            %v976 = vsub.f32 %v956, %v972
            %v977 = vsub.f32 %v957, %v973
            %979 = vset.pattern.permute.xlu0 0
            %980 = vperm.xlu0 %979, %v966
            %v981 = vpop.permute.xlu0 %980
            %984 = vset.pattern.permute.xlu0 0
            %985 = vperm.xlu0 %984, %v967
            %v986 = vpop.permute.xlu0 %985
            %989 = vset.pattern.permute.xlu0 0
            %990 = vperm.xlu0 %989, %v968
            %v991 = vpop.permute.xlu0 %990
            %994 = vset.pattern.permute.xlu0 0
            %995 = vperm.xlu0 %994, %v969
            %v996 = vpop.permute.xlu0 %995
            %v998 = vmul.f32 %v842, %v981
            %v999 = vmul.f32 %v847, %v986
            %v1000 = vmul.f32 %v852, %v991
            %v1001 = vmul.f32 %v857, %v996
            %1003 = vset.pattern.permute.xlu0 0
            %1004 = vperm.xlu0 %1003, %v974
            %v1005 = vpop.permute.xlu0 %1004
            %1008 = vset.pattern.permute.xlu0 0
            %1009 = vperm.xlu0 %1008, %v975
            %v1010 = vpop.permute.xlu0 %1009
            %1013 = vset.pattern.permute.xlu0 0
            %1014 = vperm.xlu0 %1013, %v976
            %v1015 = vpop.permute.xlu0 %1014
            %1018 = vset.pattern.permute.xlu0 0
            %1019 = vperm.xlu0 %1018, %v977
            %v1020 = vpop.permute.xlu0 %1019
            %v1022 = vadd.f32 %v998, %v1005
            %v1023 = vadd.f32 %v999, %v1010
            %v1024 = vadd.f32 %v1000, %v1015
            %v1025 = vadd.f32 %v1001, %v1020
            %v1026 = vmax.f32 %v1022, 0.0
            %v1027 = vmax.f32 %v1023, 0.0
            %v1028 = vmax.f32 %v1024, 0.0
            %v1029 = vmax.f32 %v1025, 0.0
            %v1030 = vld [vmem:[%s3] sm:$0xff]
            %v1031 = vld [vmem:[%s3 + $0x8] sm:$0xff]
            %vm1032 = vcmask 261120
            %v1034 = vsel %vm1032, %v1030, 0
            %v1037 = vsel %vm1032, %v1031, 0
            %1039 = vmatprep.subr.mxu0 0.0
            %1040 = vmatpush1.msra.mxu0 %v1026
            %1041 = vmatprep.subr.mxu0 0.0
            %1042 = vmatpush1.msra.mxu0 %v1027
            %1043 = vmatprep.subr.mxu0 0.0
            %1044 = vmatpush1.msra.mxu0 %v1028
            %1045 = vmatprep.subr.mxu0 0.0
            %1046 = vmatpush1.msra.mxu0 %v1029
            %1047 = vmatprep.subr.mxu0 0.0
            %1048 = vmatpush1.msra.mxu0 0.0
            %1049 = vmatprep.subr.mxu0 0.0
            %1050 = vmatpush1.msra.mxu0 0.0
            %1051 = vmatprep.subr.mxu0 0.0
            %1052 = vmatpush1.msra.mxu0 0.0
            %1053 = vmatprep.subr.mxu0 0.0
            %1054 = vmatpush1.msra.mxu0 0.0
            %1055 = vmatprep.subr.mxu0 0.0
            %1056 = vmatpush1.msra.mxu0 0.0
            %1057 = vmatprep.subr.mxu0 0.0
            %1058 = vmatpush1.msra.mxu0 0.0
            %1059 = vmatprep.subr.mxu0 0.0
            %1060 = vmatpush1.msra.mxu0 0.0
            %1061 = vmatprep.subr.mxu0 0.0
            %1062 = vmatpush1.msra.mxu0 0.0
            %1063 = vmatprep.subr.mxu0 0.0
            %1064 = vmatpush1.msra.mxu0 0.0
            %1065 = vmatprep.subr.mxu0 0.0
            %1066 = vmatpush1.msra.mxu0 0.0
            %1067 = vmatprep.subr.mxu0 0.0
            %1068 = vmatpush1.msra.mxu0 0.0
            %1069 = vmatprep.subr.mxu0 0.0
            %1070 = vmatpush1.msra.mxu0 0.0
            %1071 = vmatprep.subr.mxu0 0.0
            %1072 = vmatpush1.msra.mxu0 0.0
            %1073 = vmatprep.subr.mxu0 0.0
            %1074 = vmatpush1.msra.mxu0 0.0
            %1075 = vmatprep.subr.mxu0 0.0
            %1076 = vmatpush1.msra.mxu0 0.0
            %1077 = vmatprep.subr.mxu0 0.0
            %1078 = vmatpush1.msra.mxu0 0.0
            %1079 = vmatprep.subr.mxu0 0.0
            %1080 = vmatpush1.msra.mxu0 0.0
            %1081 = vmatprep.subr.mxu0 0.0
            %1082 = vmatpush1.msra.mxu0 0.0
            %1083 = vmatprep.subr.mxu0 0.0
            %1084 = vmatpush1.msra.mxu0 0.0
            %1085 = vmatprep.subr.mxu0 0.0
            %1086 = vmatpush1.msra.mxu0 0.0
            %1087 = vmatprep.subr.mxu0 0.0
            %1088 = vmatpush1.msra.mxu0 0.0
            %1089 = vmatprep.subr.mxu0 0.0
            %1090 = vmatpush1.msra.mxu0 0.0
            %1091 = vmatprep.subr.mxu0 0.0
            %1092 = vmatpush1.msra.mxu0 0.0
            %1093 = vmatprep.subr.mxu0 0.0
            %1094 = vmatpush1.msra.mxu0 0.0
            %1095 = vmatprep.subr.mxu0 0.0
            %1096 = vmatpush1.msra.mxu0 0.0
            %1097 = vmatprep.subr.mxu0 0.0
            %1098 = vmatpush1.msra.mxu0 0.0
            %1099 = vmatprep.subr.mxu0 0.0
            %1100 = vmatpush1.msra.mxu0 0.0
            %1101 = vmatprep.subr.mxu0 0.0
            %1102 = vmatpush1.msra.mxu0 0.0
            %1103 = vmatprep.mubr.f32.mxu0 0.0
            %1104 = vmatmul.mubr.f32.gmra.mrb[0].mxu0 %v1034
            %v1105 = vpop.f32.mrb[0].mxu0
            %v1106 = vadd.f32 0.0, %v1105
            %v1107 = vpop.f32.mrb[0].mxu0
            %1108 = vmatprep.mubr.f32.mxu0 0.0
            %1109 = vmatmul.mubr.f32.gmra.mrb[0].mxu0 %v1037
            %v1110 = vpop.f32.mrb[0].mxu0
            %v1111 = vadd.f32 0.0, %v1110
            %v1112 = vpop.f32.mrb[0].mxu0
            %1113 = vdwg.mxu0
            %p1114 = scmp.eq.s32.totalorder %s22, 2
            // Predicated region
            $region65: #{discriminator_z.1} parent=63 // pred_check
              %p1115 = pneg %p1114
            $region66: #{discriminator_z.1} parent=63 // pred_check_branch
              %1117 = sbr.rel (%p1115) target = $region68
            $region67: #{discriminator_z.1} parent=63 // pred_region
              %v1118 = vld [vmem:[#allocation2 + $0x60] sm:$0xff]
              %v1119 = vld [vmem:[#allocation2 + $0x68] sm:$0xff]
              %vm1120 = vcmask 64512
              %v1121 = vsel %vm1120, %v1106, 0.0
              %1122 = vadd.xlane.f32.xlu0 %v1121
              %v1123 = vpop.xlane.xlu0 %1122
              %v1124 = vsel %vm1120, %v1111, 0.0
              %1125 = vadd.xlane.f32.xlu0 %v1124
              %v1126 = vpop.xlane.xlu0 %1125
              %v1127 = vadd.f32 %v1118, %v1123
              %v1128 = vadd.f32 %v1119, %v1126
              %vm1129 = vcmask 7168
              %1130 = vst.msk [vmem:[#allocation2 + $0x60] sm:$0xff] %vm1129, %v1127
              %1131 = vst.msk [vmem:[#allocation2 + $0x68] sm:$0xff] %vm1129, %v1128
              %v1132 = vld [vmem:[#allocation3 + $0x60] sm:$0xff]
              %v1133 = vld [vmem:[#allocation3 + $0x68] sm:$0xff]
              %v1134 = vmul.f32 %v1106, %v1106
              %v1135 = vmul.f32 %v1111, %v1111
              %v1136 = vsel %vm1120, %v1134, 0.0
              %1137 = vadd.xlane.f32.xlu0 %v1136
              %v1138 = vpop.xlane.xlu0 %1137
              %v1139 = vsel %vm1120, %v1135, 0.0
              %1140 = vadd.xlane.f32.xlu0 %v1139
              %v1141 = vpop.xlane.xlu0 %1140
              %v1142 = vadd.f32 %v1132, %v1138
              %v1143 = vadd.f32 %v1133, %v1141
              %1144 = vst.msk [vmem:[#allocation3 + $0x60] sm:$0xff] %vm1129, %v1142
              %1145 = vst.msk [vmem:[#allocation3 + $0x68] sm:$0xff] %vm1129, %v1143
            $region68: #{discriminator_z.1} parent=63 // pred_fallthru
              _
            %p1146 = scmp.eq.s32.totalorder %s22, 3
            // Predicated region
            $region69: #{discriminator_z.1} parent=63 // pred_check
              %p1147 = pneg %p1146
            $region70: #{discriminator_z.1} parent=63 // pred_check_branch
              %1149 = sbr.rel (%p1147) target = $region72
            $region71: #{discriminator_z.1} parent=63 // pred_region
              %v1150 = vld [vmem:[#allocation2 + $0x60] sm:$0xff]
              %v1151 = vld [vmem:[#allocation2 + $0x68] sm:$0xff]
              %v1152 = vmul.f32 %v1150, 0.125
              %v1153 = vmul.f32 %v1151, 0.125
              %v1154 = vld [vmem:[#allocation3 + $0x60] sm:$0xff]
              %v1155 = vld [vmem:[#allocation3 + $0x68] sm:$0xff]
              %v1156 = vmul.f32 %v1154, 0.125
              %v1157 = vmul.f32 %v1155, 0.125
              %v1158 = vmul.f32 %v1152, %v1152
              %v1159 = vmul.f32 %v1153, %v1153
              %v1160 = vsub.f32 %v1156, %v1158
              %v1161 = vsub.f32 %v1157, %v1159
              %v1162 = vmax.f32 %v1160, 0.0
              %v1163 = vmax.f32 %v1161, 0.0
              %v1164 = vld [vmem:[%s5 + $0xc0] sm:$0xff]
              %v1165 = vld [vmem:[%s5 + $0xc8] sm:$0xff]
              %v1166 = vld [vmem:[%s5 + $0xd0] sm:$0xff]
              %v1167 = vld [vmem:[%s5 + $0xd8] sm:$0xff]
              %v1168 = vadd.f32 %v1162, 1e-05
              %v1169 = vadd.f32 %v1163, 1e-05
              %v1170 = vrsqrt.pop %v1168
              %v1171 = vrsqrt.pop %v1169
              %v1172 = vmul.f32 %v1164, %v1170
              %v1173 = vmul.f32 %v1165, %v1171
              %v1174 = vmul.f32 %v1152, %v1172
              %v1175 = vmul.f32 %v1153, %v1173
              %v1176 = vsub.f32 %v1166, %v1174
              %v1177 = vsub.f32 %v1167, %v1175
              %1179 = vset.pattern.permute.xlu0 0
              %1180 = vperm.xlu0 %1179, %v1172
              %v1181 = vpop.permute.xlu0 %1180
              %1184 = vset.pattern.permute.xlu0 0
              %1185 = vperm.xlu0 %1184, %v1173
              %v1186 = vpop.permute.xlu0 %1185
              %v1188 = vmul.f32 %v1106, %v1181
              %v1189 = vmul.f32 %v1111, %v1186
              %1191 = vset.pattern.permute.xlu0 0
              %1192 = vperm.xlu0 %1191, %v1176
              %v1193 = vpop.permute.xlu0 %1192
              %1196 = vset.pattern.permute.xlu0 0
              %1197 = vperm.xlu0 %1196, %v1177
              %v1198 = vpop.permute.xlu0 %1197
              %v1200 = vadd.f32 %v1188, %v1193
              %v1201 = vadd.f32 %v1189, %v1198
              %v1202 = vmax.f32 %v1200, 0.0
              %v1203 = vmax.f32 %v1201, 0.0
              %v1204 = vld [vmem:[%s5 + $0xe0] sm:$0x1]
              %v1205 = vld [vmem:[%s4] sm:$0xff]
              %v1206 = vld [vmem:[%s4 + $0x8] sm:$0xff]
              %1208 = vset.pattern.permute.xlu0 0
              %1209 = vperm.xlu0 %1208, %v1205
              %v1210 = vpop.permute.xlu0 %1209
              %1213 = vset.pattern.permute.xlu0 0
              %1214 = vperm.xlu0 %1213, %v1206
              %v1215 = vpop.permute.xlu0 %1214
              %v1217 = vmul.f32 %v1202, %v1210
              %v1218 = vmul.f32 %v1203, %v1215
              %vm1219 = vcmask 64512
              %v1220 = vsel %vm1219, %v1217, 0.0
              %v1221 = vsel %vm1219, %v1218, 0.0
              %v1222 = vadd.f32 %v1220, %v1221
              %v1223 = vrot.slane %v1222, 4
              %v1224 = vadd.f32 %v1222, %v1223
              %v1225 = vrot.slane %v1224, 2
              %v1226 = vadd.f32 %v1224, %v1225
              %v1227 = vrot.slane %v1226, 1
              %v1228 = vadd.f32 %v1226, %v1227
              %1230 = vset.pattern.permute.xlu0 0
              %1231 = vperm.xlu0 %1230, %v1204
              %v1232 = vpop.permute.xlu0 %1231
              %v1234 = vadd.f32 %v1228, %v1232
              %vm1235 = vcmask 57344
              %1236 = vst.msk [vmem:[#allocation4] sm:$0x1] %vm1235, %v1234
            $region72: #{discriminator_z.1} parent=63 // pred_fallthru
              _
          $region64: #{discriminator_z.1} parent=55 // pred_fallthru
            _
        $region56: #{discriminator_z.1} parent=43 // pred_fallthru
          _
        // Predicated region
        $region73: #{discriminator_z.1} parent=43 // pred_check
          %p1237 = pneg %p179
        $region74: #{discriminator_z.1} parent=43 // pred_check_branch
          %1239 = sbr.rel (%p1237) target = $region76
        $region75: #{discriminator_z.1} parent=43 // pred_region
          %s1241 = ssub.s32 16, 16
          %1242 = vsyncadd [#allocation5], %s1241
          %s1243 = smul.addr %s23, 16
          %s1244 = scalar_lea.hbm %s6, %s1243
          %s1246 = sshll.u32 [#allocation4], 4
          %s1247 = int_to_ptr.vmem [resolvable:$true] %s1246
          %1249 = dma.vmem_to_hbm [thread:$0]  %s1247, 16, %s1244, [#allocation5]
        $region76: #{discriminator_z.1} parent=43 // pred_fallthru
          _
        // Predicated region
        $region77: #{discriminator_z.1} parent=43 // pred_check
          %p1250 = pneg %p179
        $region78: #{discriminator_z.1} parent=43 // pred_check_branch
          %1252 = sbr.rel (%p1250) target = $region80
        $region79: #{discriminator_z.1} parent=43 // pred_region
          %1253 = dma.done [#allocation5], 16
        $region80: #{discriminator_z.1} parent=43 // pred_fallthru
          _
      $region44: #{discriminator_z.1} parent=5 // pred_fallthru
        _
      %p1254 = scmp.le.s32.totalorder 2, %s13
      // Predicated region
      $region81: #{discriminator_z.1} parent=5 // pred_check
        %p1255 = pneg %p1254
      $region82: #{discriminator_z.1} parent=5 // pred_check_branch
        %1257 = sbr.rel (%p1255) target = $region84
      $region83: #{discriminator_z.1} parent=5 // pred_region
        %s1258 = ssub.s32 %s13, 2
      $region84: #{discriminator_z.1} parent=5 // pred_fallthru
        _
    $region6: #{discriminator_z.1} parent=1 // loop_footer
      %s17 = sadd.s32 1, %s13
    $region7: #{discriminator_z.1} parent=1 // loop_footer_branch
      %12 = sbr.rel target = $region3
    $region8: #{discriminator_z.1} parent=1 // loop_exit
      _
    %1259 = vsyncpa [#allocation5], 1
    %s1260 = scalar_lea.sflag [#allocation5], 1
    %1261 = vsyncpa %s1260, 1

</llo_original>
